<compile_context>
chip_gen: v7x
topology: tpu7x:2x2x1
jax: 0.10.0
libtpu: 0.0.40
codegen_flags: <defaults>
</compile_context>

<pallas_src>
import functools
from math import sqrt

import jax
import jax.numpy as jnp
from jax.experimental import pallas as pl
from jax.experimental.pallas import tpu as pltpu

LANE = 128
SUBLANE = 8


def _round_up(n, m):
    return ((n + m - 1) // m) * m


def _pad_axis(x, axis, multiple):
    """Zero-pad `axis` of x up to the next multiple of `multiple`."""
    pad = (-x.shape[axis]) % multiple
    if pad == 0:
        return x
    cfg = [(0, 0)] * x.ndim
    cfg[axis] = (0, pad)
    return jnp.pad(x, cfg)


# ----------------------------------------------------------------------------
# Fused kernel: grid = (Mp // tm,) over flattened (B*L) query rows.
#   K/V projection runs once (step 0) into VMEM scratch; every step does the
#   Q projection, heads-batched attention and the output projection.
# ----------------------------------------------------------------------------
def _qformer_kernel(tgt_ref, src_ref, val_ref,
                    wq_ref, bq_ref, wk_ref, bk_ref, wv_ref, bv_ref,
                    wo_ref, bo_ref, o_ref,
                    k_scr, v_scr, *, n_heads, d_keys, scale):
    f32 = jnp.float32
    bf16 = jnp.bfloat16
    TM = tgt_ref.shape[0]
    S = src_ref.shape[0]
    H, E = n_heads, d_keys

    # ---- K / V projections: batch/tile independent -> compute once ----
    @pl.when(pl.program_id(0) == 0)
    def _():
        k = jnp.dot(src_ref[...], wk_ref[...], preferred_element_type=f32) + bk_ref[...]
        v = jnp.dot(val_ref[...], wv_ref[...], preferred_element_type=f32) + bv_ref[...]
        k_scr[...] = k.astype(bf16)
        v_scr[...] = v.astype(bf16)

    # ---- Q projection for this M-tile (weights pre-transposed to (d_in, d_out)) ----
    q = jnp.dot(tgt_ref[...], wq_ref[...], preferred_element_type=f32) + bq_ref[...]

    # Fold 1/sqrt(E) into q once; split heads once (no per-head lane slices).
    q3 = (q * scale).reshape(TM, H, E).astype(bf16)   # (TM, H, E)
    k3 = k_scr[...].reshape(S, H, E)                  # (S, H, E) bf16
    v3 = v_scr[...].reshape(S, H, E)                  # (S, H, E) bf16

    # Heads-batched score matmul + softmax over S.
    s = jnp.einsum("lhe,she->hls", q3, k3, preferred_element_type=f32)  # (H, TM, S)
    m = jnp.max(s, axis=-1, keepdims=True)
    p = jnp.exp(s - m)
    a = p * pl.reciprocal(jnp.sum(p, axis=-1, keepdims=True), approx=True)

    # Heads-batched AV, then output projection.
    rep = jnp.einsum("hls,she->lhe", a.astype(bf16), v3,
                     preferred_element_type=f32)      # (TM, H, E)
    rep = rep.reshape(TM, H * E).astype(bf16)         # (TM, H*E)

    out = jnp.dot(rep, wo_ref[...], preferred_element_type=f32) + bo_ref[...]
    o_ref[...] = out.astype(o_ref.dtype)


def qformer_st_pallas(target, source, value, params, n_heads):
    """target: (B, L, d_model); source, value: (S, d_llm) -> (B, L, d_llm)."""
    B, L, d_model = target.shape
    S, d_llm = source.shape
    he = params["wq"].shape[0]          # n_heads * d_keys
    d_keys = he // n_heads
    scale = 1.0 / sqrt(d_keys)

    bf16 = jnp.bfloat16
    f32 = jnp.float32

    # Flatten batch into the row axis (exactly equivalent: softmax is per row,
    # K/V are batch-independent) and pick an M tile.
    M = B * L
    tm = min(256, _round_up(M, SUBLANE))
    Mp = _round_up(M, tm)

    # Host-side layout plumbing (done once, outside the kernel):
    #  * pre-transpose weights to (d_in, d_out)
    #  * zero-pad feature dims to lane multiples (contributes exactly 0)
    #  * zero-pad M to the tile size (extra rows are sliced off afterwards)
    #  * cast MXU operands to bf16; biases stay fp32 (post-accumulation add).
    tgt_p = _pad_axis(_pad_axis(target.reshape(M, d_model), 0, tm), 1, LANE).astype(bf16)
    src_p = _pad_axis(source, 1, LANE).astype(bf16)           # (S, dlp)
    val_p = _pad_axis(value, 1, LANE).astype(bf16)            # (S, dlp)

    wq_t = _pad_axis(params["wq"].T, 0, LANE).astype(bf16)    # (dmp, he)
    wk_t = _pad_axis(params["wk"].T, 0, LANE).astype(bf16)    # (dlp, he)
    wv_t = _pad_axis(params["wv"].T, 0, LANE).astype(bf16)    # (dlp, he)
    wo_t = _pad_axis(params["wo"].T, 1, LANE).astype(bf16)    # (he, dlp)

    bq = params["bq"].reshape(1, he).astype(f32)
    bk = params["bk"].reshape(1, he).astype(f32)
    bv = params["bv"].reshape(1, he).astype(f32)
    bo = _pad_axis(params["bo"].reshape(1, d_llm), 1, LANE).astype(f32)

    dmp = tgt_p.shape[1]
    dlp = src_p.shape[1]

    kernel = functools.partial(
        _qformer_kernel, n_heads=n_heads, d_keys=d_keys, scale=scale)

    out_p = pl.pallas_call(
        kernel,
        out_shape=jax.ShapeDtypeStruct((Mp, dlp), f32),
        grid=(Mp // tm,),
        in_specs=[
            pl.BlockSpec((tm, dmp), lambda i: (i, 0)),     # target rows (this tile)
            pl.BlockSpec((S, dlp), lambda i: (0, 0)),      # source
            pl.BlockSpec((S, dlp), lambda i: (0, 0)),      # value
            pl.BlockSpec((dmp, he), lambda i: (0, 0)),     # wq^T
            pl.BlockSpec((1, he), lambda i: (0, 0)),       # bq
            pl.BlockSpec((dlp, he), lambda i: (0, 0)),     # wk^T
            pl.BlockSpec((1, he), lambda i: (0, 0)),       # bk
            pl.BlockSpec((dlp, he), lambda i: (0, 0)),     # wv^T
            pl.BlockSpec((1, he), lambda i: (0, 0)),       # bv
            pl.BlockSpec((he, dlp), lambda i: (0, 0)),     # wo^T
            pl.BlockSpec((1, dlp), lambda i: (0, 0)),      # bo
        ],
        out_specs=pl.BlockSpec((tm, dlp), lambda i: (i, 0)),
        scratch_shapes=[
            pltpu.VMEM((S, he), bf16),     # projected K (persists across M tiles)
            pltpu.VMEM((S, he), bf16),     # projected V
        ],
        compiler_params=pltpu.CompilerParams(
            # "arbitrary": the K/V scratch is written at step 0 and read by all
            # later steps, so the M-tile axis must run sequentially on one core.
            dimension_semantics=("arbitrary",),
        ),
    )(tgt_p, src_p, val_p, wq_t, bq, wk_t, bk, wv_t, bv, wo_t, bo)

    # Strip M padding and the lane padding of d_llm.
    return out_p[:M, :d_llm].reshape(B, L, d_llm)


# ----------------------------------------------------------------------------
# Pure-JAX reference (mirrors the PyTorch forward, dropout in eval mode)
# ----------------------------------------------------------------------------
def qformer_st_ref(target, source, value, params, n_heads):
    B, L, _ = target.shape
    S, _ = source.shape
    he = params["wq"].shape[0]
    E = he // n_heads

    q = target @ params["wq"].T + params["bq"]            # (B, L, H*E)
    k = source @ params["wk"].T + params["bk"]            # (S, H*E)
    v = value @ params["wv"].T + params["bv"]              # (S, H*E)
    q = q.reshape(B, L, n_heads, E)
    k = k.reshape(S, n_heads, E)
    v = v.reshape(S, n_heads, E)
    scale = 1.0 / sqrt(E)
    scores = jnp.einsum("blhe,she->bhls", q, k)
    A = jax.nn.softmax(scale * scores, axis=-1)
    rep = jnp.einsum("bhls,she->blhe", A, v).reshape(B, L, he)
    return rep @ params["wo"].T + params["bo"]


if __name__ == "__main__":
    # Small deterministic problem: d_model=32, n_heads=4 -> d_keys=8, d_llm=48
    B, L, S = 2, 8, 8
    d_model, n_heads, d_llm = 32, 4, 48
    d_keys = d_model // n_heads
    he = d_keys * n_heads

    key = jax.random.PRNGKey(0)
    keys = jax.random.split(key, 11)

    params = {
        "wq": 0.05 * jax.random.normal(keys[0], (he, d_model), jnp.float32),
        "bq": 0.05 * jax.random.normal(keys[1], (he,), jnp.float32),
        "wk": 0.05 * jax.random.normal(keys[2], (he, d_llm), jnp.float32),
        "bk": 0.05 * jax.random.normal(keys[3], (he,), jnp.float32),
        "wv": 0.05 * jax.random.normal(keys[4], (he, d_llm), jnp.float32),
        "bv": 0.05 * jax.random.normal(keys[5], (he,), jnp.float32),
        "wo": 0.05 * jax.random.normal(keys[6], (d_llm, he), jnp.float32),
        "bo": 0.05 * jax.random.normal(keys[7], (d_llm,), jnp.float32),
    }

    target = jax.random.normal(keys[8], (B, L, d_model), jnp.float32)
    source = jax.random.normal(keys[9], (S, d_llm), jnp.float32)
    value = jax.random.normal(keys[10], (S, d_llm), jnp.float32)

    out = qformer_st_pallas(target, source, value, params, n_heads)
    out = jax.block_until_ready(out)

    ref = qformer_st_ref(target, source, value, params, n_heads)
    assert out.shape == (B, L, d_llm), out.shape
    # bf16 MXU operands + approx reciprocal -> slightly looser tolerance than fp32.
    assert jnp.allclose(out, ref, atol=1e-2, rtol=1e-2), "mismatch vs reference"

    print("KERNEL_OK")
</pallas_src>

<mosaic_0001>
module attributes {stable_mosaic.version = 11 : i64} {
  func.func @_qformer_kernel(%arg0: i32, %arg1: memref<16x128xbf16, #tpu.memory_space<vmem>>, %arg2: memref<8x128xbf16, #tpu.memory_space<vmem>>, %arg3: memref<8x128xbf16, #tpu.memory_space<vmem>>, %arg4: memref<128x32xbf16, #tpu.memory_space<vmem>>, %arg5: memref<1x32xf32, #tpu.memory_space<vmem>>, %arg6: memref<128x32xbf16, #tpu.memory_space<vmem>>, %arg7: memref<1x32xf32, #tpu.memory_space<vmem>>, %arg8: memref<128x32xbf16, #tpu.memory_space<vmem>>, %arg9: memref<1x32xf32, #tpu.memory_space<vmem>>, %arg10: memref<32x128xbf16, #tpu.memory_space<vmem>>, %arg11: memref<1x128xf32, #tpu.memory_space<vmem>>, %arg12: memref<16x128xf32, #tpu.memory_space<vmem>>, %arg13: memref<8x32xbf16, #tpu.memory_space<vmem>>, %arg14: memref<8x32xbf16, #tpu.memory_space<vmem>>) attributes {dimension_semantics = [#tpu.dimension_semantics<arbitrary>], iteration_bounds = array<i64: 1>, scalar_prefetch = 0 : i64, scratch_operands = 2 : i64, tpu.core_type = #tpu.core_type<tc>, window_params = [{transform_indices = @transform_0, window_bounds = array<i64: 16, 128>}, {pipeline_mode = #tpu.pipeline_mode<synchronous>, transform_indices = @transform_1, window_bounds = array<i64: 8, 128>}, {pipeline_mode = #tpu.pipeline_mode<synchronous>, transform_indices = @transform_2, window_bounds = array<i64: 8, 128>}, {pipeline_mode = #tpu.pipeline_mode<synchronous>, transform_indices = @transform_3, window_bounds = array<i64: 128, 32>}, {pipeline_mode = #tpu.pipeline_mode<synchronous>, transform_indices = @transform_4, window_bounds = array<i64: 1, 32>}, {pipeline_mode = #tpu.pipeline_mode<synchronous>, transform_indices = @transform_5, window_bounds = array<i64: 128, 32>}, {pipeline_mode = #tpu.pipeline_mode<synchronous>, transform_indices = @transform_6, window_bounds = array<i64: 1, 32>}, {pipeline_mode = #tpu.pipeline_mode<synchronous>, transform_indices = @transform_7, window_bounds = array<i64: 128, 32>}, {pipeline_mode = #tpu.pipeline_mode<synchronous>, transform_indices = @transform_8, window_bounds = array<i64: 1, 32>}, {pipeline_mode = #tpu.pipeline_mode<synchronous>, transform_indices = @transform_9, window_bounds = array<i64: 32, 128>}, {pipeline_mode = #tpu.pipeline_mode<synchronous>, transform_indices = @transform_10, window_bounds = array<i64: 1, 128>}, {transform_indices = @transform_11, window_bounds = array<i64: 16, 128>}]} {
    %c0_i32 = arith.constant 0 : i32
    %0 = arith.cmpi eq, %arg0, %c0_i32 : i32
    %1 = arith.extui %0 : i1 to i32
    %c0_i32_0 = arith.constant 0 : i32
    %2 = arith.cmpi ne, %1, %c0_i32_0 : i32
    scf.if %2 {
      %c0_22 = arith.constant 0 : index
      %c0_23 = arith.constant 0 : index
      %39 = vector.load %arg2[%c0_22, %c0_23] : memref<8x128xbf16, #tpu.memory_space<vmem>>, vector<8x128xbf16>
      %c0_24 = arith.constant 0 : index
      %c0_25 = arith.constant 0 : index
      %40 = vector.load %arg6[%c0_24, %c0_25] : memref<128x32xbf16, #tpu.memory_space<vmem>>, vector<128x32xbf16>
      %cst_26 = arith.constant dense<0.000000e+00> : vector<8x32xf32>
      %41 = tpu.matmul %39, %40, %cst_26 {dimension_numbers = #tpu.dot_dimension_numbers<[1], [0], [0], [1], [0, 0, 1, 1], [], []>} : vector<8x128xbf16>, vector<128x32xbf16>, vector<8x32xf32> -> vector<8x32xf32>
      %c0_27 = arith.constant 0 : index
      %c0_28 = arith.constant 0 : index
      %42 = vector.load %arg7[%c0_27, %c0_28] : memref<1x32xf32, #tpu.memory_space<vmem>>, vector<1x32xf32>
      %43 = vector.broadcast %42 : vector<1x32xf32> to vector<8x32xf32>
      %44 = arith.addf %41, %43 : vector<8x32xf32>
      %c0_29 = arith.constant 0 : index
      %c0_30 = arith.constant 0 : index
      %45 = vector.load %arg3[%c0_29, %c0_30] : memref<8x128xbf16, #tpu.memory_space<vmem>>, vector<8x128xbf16>
      %c0_31 = arith.constant 0 : index
      %c0_32 = arith.constant 0 : index
      %46 = vector.load %arg8[%c0_31, %c0_32] : memref<128x32xbf16, #tpu.memory_space<vmem>>, vector<128x32xbf16>
      %cst_33 = arith.constant dense<0.000000e+00> : vector<8x32xf32>
      %47 = tpu.matmul %45, %46, %cst_33 {dimension_numbers = #tpu.dot_dimension_numbers<[1], [0], [0], [1], [0, 0, 1, 1], [], []>} : vector<8x128xbf16>, vector<128x32xbf16>, vector<8x32xf32> -> vector<8x32xf32>
      %c0_34 = arith.constant 0 : index
      %c0_35 = arith.constant 0 : index
      %48 = vector.load %arg9[%c0_34, %c0_35] : memref<1x32xf32, #tpu.memory_space<vmem>>, vector<1x32xf32>
      %49 = vector.broadcast %48 : vector<1x32xf32> to vector<8x32xf32>
      %50 = arith.addf %47, %49 : vector<8x32xf32>
      %51 = arith.truncf %44 : vector<8x32xf32> to vector<8x32xbf16>
      %c0_36 = arith.constant 0 : index
      %c0_37 = arith.constant 0 : index
      %52 = vector.load %arg13[%c0_36, %c0_37] : memref<8x32xbf16, #tpu.memory_space<vmem>>, vector<8x32xbf16>
      tpu.vector_store %arg13[%c0_36, %c0_37], %51 {strides = array<i32>} : memref<8x32xbf16, #tpu.memory_space<vmem>>, vector<8x32xbf16>,
      %53 = arith.truncf %50 : vector<8x32xf32> to vector<8x32xbf16>
      %c0_38 = arith.constant 0 : index
      %c0_39 = arith.constant 0 : index
      %54 = vector.load %arg14[%c0_38, %c0_39] : memref<8x32xbf16, #tpu.memory_space<vmem>>, vector<8x32xbf16>
      tpu.vector_store %arg14[%c0_38, %c0_39], %53 {strides = array<i32>} : memref<8x32xbf16, #tpu.memory_space<vmem>>, vector<8x32xbf16>,
    } else {
    }
    %c0 = arith.constant 0 : index
    %c0_1 = arith.constant 0 : index
    %3 = vector.load %arg1[%c0, %c0_1] : memref<16x128xbf16, #tpu.memory_space<vmem>>, vector<16x128xbf16>
    %c0_2 = arith.constant 0 : index
    %c0_3 = arith.constant 0 : index
    %4 = vector.load %arg4[%c0_2, %c0_3] : memref<128x32xbf16, #tpu.memory_space<vmem>>, vector<128x32xbf16>
    %cst = arith.constant dense<0.000000e+00> : vector<16x32xf32>
    %5 = tpu.matmul %3, %4, %cst {dimension_numbers = #tpu.dot_dimension_numbers<[1], [0], [0], [1], [0, 0, 1, 1], [], []>} : vector<16x128xbf16>, vector<128x32xbf16>, vector<16x32xf32> -> vector<16x32xf32>
    %c0_4 = arith.constant 0 : index
    %c0_5 = arith.constant 0 : index
    %6 = vector.load %arg5[%c0_4, %c0_5] : memref<1x32xf32, #tpu.memory_space<vmem>>, vector<1x32xf32>
    %7 = vector.broadcast %6 : vector<1x32xf32> to vector<16x32xf32>
    %8 = arith.addf %5, %7 : vector<16x32xf32>
    %cst_6 = arith.constant 0.353553385 : f32
    %9 = vector.broadcast %cst_6 : f32 to vector<16x32xf32>
    %10 = arith.mulf %8, %9 : vector<16x32xf32>
    %11 = vector.shape_cast %10 : vector<16x32xf32> to vector<16x4x8xf32>
    %12 = arith.truncf %11 : vector<16x4x8xf32> to vector<16x4x8xbf16>
    %c0_7 = arith.constant 0 : index
    %c0_8 = arith.constant 0 : index
    %13 = vector.load %arg13[%c0_7, %c0_8] : memref<8x32xbf16, #tpu.memory_space<vmem>>, vector<8x32xbf16>
    %14 = vector.shape_cast %13 : vector<8x32xbf16> to vector<8x4x8xbf16>
    %c0_9 = arith.constant 0 : index
    %c0_10 = arith.constant 0 : index
    %15 = vector.load %arg14[%c0_9, %c0_10] : memref<8x32xbf16, #tpu.memory_space<vmem>>, vector<8x32xbf16>
    %16 = vector.shape_cast %15 : vector<8x32xbf16> to vector<8x4x8xbf16>
    "tpu.trace_start"() <{level = 10 : i32, message = "lhe,she->hls"}> : () -> ()
    %cst_11 = arith.constant dense<0.000000e+00> : vector<4x16x8xf32>
    %17 = tpu.matmul %12, %14, %cst_11 {dimension_numbers = #tpu.dot_dimension_numbers<[2], [2], [0], [0], [0, 1, 0, 0, 1, 0], [1], [1]>} : vector<16x4x8xbf16>, vector<8x4x8xbf16>, vector<4x16x8xf32> -> vector<4x16x8xf32>
    "tpu.trace_stop"() : () -> ()
    %cst_12 = arith.constant dense<0xFF800000> : vector<4x16xf32>
    %18 = vector.multi_reduction <maximumf>, %17, %cst_12 [2] : vector<4x16x8xf32> to vector<4x16xf32>
    %19 = vector.shape_cast %18 : vector<4x16xf32> to vector<4x16x1xf32>
    %20 = vector.broadcast %19 : vector<4x16x1xf32> to vector<4x16x8xf32>
    %21 = arith.subf %17, %20 : vector<4x16x8xf32>
    %22 = math.exp %21 : vector<4x16x8xf32>
    %cst_13 = arith.constant dense<0.000000e+00> : vector<4x16xf32>
    %23 = vector.multi_reduction <add>, %22, %cst_13 [2] : vector<4x16x8xf32> to vector<4x16xf32>
    %24 = vector.shape_cast %23 : vector<4x16xf32> to vector<4x16x1xf32>
    %25 = tpu.reciprocal %24 {approx = true} : vector<4x16x1xf32> -> vector<4x16x1xf32>
    %26 = vector.broadcast %25 : vector<4x16x1xf32> to vector<4x16x8xf32>
    %27 = arith.mulf %22, %26 : vector<4x16x8xf32>
    %28 = arith.truncf %27 : vector<4x16x8xf32> to vector<4x16x8xbf16>
    "tpu.trace_start"() <{level = 10 : i32, message = "hls,she->lhe"}> : () -> ()
    %cst_14 = arith.constant dense<0.000000e+00> : vector<4x8x16xf32>
    %29 = tpu.matmul %16, %28, %cst_14 {dimension_numbers = #tpu.dot_dimension_numbers<[0], [2], [2], [1], [0, 1, 0, 2, 1, 1], [1], [0]>} : vector<8x4x8xbf16>, vector<4x16x8xbf16>, vector<4x8x16xf32> -> vector<4x8x16xf32>
    %30 = tpu.transpose %29, [2, 0, 1] : vector<4x8x16xf32> -> vector<16x4x8xf32>
    "tpu.trace_stop"() : () -> ()
    %31 = vector.shape_cast %30 : vector<16x4x8xf32> to vector<16x32xf32>
    %32 = arith.truncf %31 : vector<16x32xf32> to vector<16x32xbf16>
    %c0_15 = arith.constant 0 : index
    %c0_16 = arith.constant 0 : index
    %33 = vector.load %arg10[%c0_15, %c0_16] : memref<32x128xbf16, #tpu.memory_space<vmem>>, vector<32x128xbf16>
    %cst_17 = arith.constant dense<0.000000e+00> : vector<16x128xf32>
    %34 = tpu.matmul %32, %33, %cst_17 {dimension_numbers = #tpu.dot_dimension_numbers<[1], [0], [0], [1], [0, 0, 1, 1], [], []>} : vector<16x32xbf16>, vector<32x128xbf16>, vector<16x128xf32> -> vector<16x128xf32>
    %c0_18 = arith.constant 0 : index
    %c0_19 = arith.constant 0 : index
    %35 = vector.load %arg11[%c0_18, %c0_19] : memref<1x128xf32, #tpu.memory_space<vmem>>, vector<1x128xf32>
    %36 = vector.broadcast %35 : vector<1x128xf32> to vector<16x128xf32>
    %37 = arith.addf %34, %36 : vector<16x128xf32>
    %c0_20 = arith.constant 0 : index
    %c0_21 = arith.constant 0 : index
    %38 = vector.load %arg12[%c0_20, %c0_21] : memref<16x128xf32, #tpu.memory_space<vmem>>, vector<16x128xf32>
    tpu.vector_store %arg12[%c0_20, %c0_21], %37 {strides = array<i32>} : memref<16x128xf32, #tpu.memory_space<vmem>>, vector<16x128xf32>,
    return
  }
  func.func @transform_0(%arg0: i32) -> (i32, i32) {
    %c0_i32 = arith.constant 0 : i32
    %c0_i32_0 = arith.constant 0 : i32
    return %arg0, %c0_i32 : i32, i32
  }
  func.func @transform_1(%arg0: i32) -> (i32, i32) {
    %c0_i32 = arith.constant 0 : i32
    %c0_i32_0 = arith.constant 0 : i32
    %c0_i32_1 = arith.constant 0 : i32
    return %c0_i32, %c0_i32_0 : i32, i32
  }
  func.func @transform_2(%arg0: i32) -> (i32, i32) {
    %c0_i32 = arith.constant 0 : i32
    %c0_i32_0 = arith.constant 0 : i32
    %c0_i32_1 = arith.constant 0 : i32
    return %c0_i32, %c0_i32_0 : i32, i32
  }
  func.func @transform_3(%arg0: i32) -> (i32, i32) {
    %c0_i32 = arith.constant 0 : i32
    %c0_i32_0 = arith.constant 0 : i32
    %c0_i32_1 = arith.constant 0 : i32
    return %c0_i32, %c0_i32_0 : i32, i32
  }
  func.func @transform_4(%arg0: i32) -> (i32, i32) {
    %c0_i32 = arith.constant 0 : i32
    %c0_i32_0 = arith.constant 0 : i32
    %c0_i32_1 = arith.constant 0 : i32
    return %c0_i32, %c0_i32_0 : i32, i32
  }
  func.func @transform_5(%arg0: i32) -> (i32, i32) {
    %c0_i32 = arith.constant 0 : i32
    %c0_i32_0 = arith.constant 0 : i32
    %c0_i32_1 = arith.constant 0 : i32
    return %c0_i32, %c0_i32_0 : i32, i32
  }
  func.func @transform_6(%arg0: i32) -> (i32, i32) {
    %c0_i32 = arith.constant 0 : i32
    %c0_i32_0 = arith.constant 0 : i32
    %c0_i32_1 = arith.constant 0 : i32
    return %c0_i32, %c0_i32_0 : i32, i32
  }
  func.func @transform_7(%arg0: i32) -> (i32, i32) {
    %c0_i32 = arith.constant 0 : i32
    %c0_i32_0 = arith.constant 0 : i32
    %c0_i32_1 = arith.constant 0 : i32
    return %c0_i32, %c0_i32_0 : i32, i32
  }
  func.func @transform_8(%arg0: i32) -> (i32, i32) {
    %c0_i32 = arith.constant 0 : i32
    %c0_i32_0 = arith.constant 0 : i32
    %c0_i32_1 = arith.constant 0 : i32
    return %c0_i32, %c0_i32_0 : i32, i32
  }
  func.func @transform_9(%arg0: i32) -> (i32, i32) {
    %c0_i32 = arith.constant 0 : i32
    %c0_i32_0 = arith.constant 0 : i32
    %c0_i32_1 = arith.constant 0 : i32
    return %c0_i32, %c0_i32_0 : i32, i32
  }
  func.func @transform_10(%arg0: i32) -> (i32, i32) {
    %c0_i32 = arith.constant 0 : i32
    %c0_i32_0 = arith.constant 0 : i32
    %c0_i32_1 = arith.constant 0 : i32
    return %c0_i32, %c0_i32_0 : i32, i32
  }
  func.func @transform_11(%arg0: i32) -> (i32, i32) {
    %c0_i32 = arith.constant 0 : i32
    %c0_i32_0 = arith.constant 0 : i32
    return %arg0, %c0_i32 : i32, i32
  }
}

</mosaic_0001>

<llo_original>
// kernel: tpu_custom_call.1
$region0: #{tpu_custom_call.1}
  #allocation0 [shape = 'u32[]', space=smem, size = 0x4, offset = 0x4, fixed_abs, tag = 'smem constant byte address 0x4 - core index']
  #allocation1 [shape = 'u32[144,128]{1,0:T(1,128)}', space=vmem, size = 0x12000, scoped, tag = 'internal scratch']
  #allocation2 [shape = 'bf16[8,32]{1,0:T(8,128)(2,1)}', space=vmem, size = 0x800, scoped, tag = 'scratch operand']
  #allocation3 [shape = 'bf16[8,32]{1,0:T(8,128)(2,1)}', space=vmem, size = 0x800, scoped, tag = 'scratch operand']
  %s0 = inlined_call_operand.vmem [shape: bf16[16,128], index: 0, kind: input, shape index: {}]
  %s1 = inlined_call_operand.vmem [shape: bf16[8,128], index: 1, kind: input, shape index: {}]
  %s2 = inlined_call_operand.vmem [shape: bf16[8,128], index: 2, kind: input, shape index: {}]
  %s3 = inlined_call_operand.vmem [shape: bf16[128,32], index: 3, kind: input, shape index: {}]
  %s4 = inlined_call_operand.vmem [shape: f32[1,32], index: 4, kind: input, shape index: {}]
  %s5 = inlined_call_operand.vmem [shape: bf16[128,32], index: 5, kind: input, shape index: {}]
  %s6 = inlined_call_operand.vmem [shape: f32[1,32], index: 6, kind: input, shape index: {}]
  %s7 = inlined_call_operand.vmem [shape: bf16[128,32], index: 7, kind: input, shape index: {}]
  %s8 = inlined_call_operand.vmem [shape: f32[1,32], index: 8, kind: input, shape index: {}]
  %s9 = inlined_call_operand.vmem [shape: bf16[32,128], index: 9, kind: input, shape index: {}]
  %s10 = inlined_call_operand.vmem [shape: f32[1,128], index: 10, kind: input, shape index: {}]
  %s11 = inlined_call_operand.hbm [shape: f32[16,128], index: 11, kind: output, shape index: {}]
  %s12 = sld [smem:[#allocation0]]
  $region58: #{tpu_custom_call.1} parent=0
    _
  %s14 = ssub.s32 1, %s12
  %s15 = scalar_select 0, %s14, %s12
  $region1: #{tpu_custom_call.1} parent=0
    #allocation4 [shape = 'u8[8192]{0}', space=vmem, size = 0x2000, scoped, tag = 'output window, operand 0, single buffered']
    #allocation5 [shape = 's32[1]{0}', space=sflag, size = 0x4, scoped, tag = 'scoped memory for tpu_custom_call.1']
    %16 = vsyncpa [#allocation5], 0
    // Predicated region
    $region2: #{tpu_custom_call.1} parent=1 // pred_check
      _
    $region3: #{tpu_custom_call.1} parent=1 // pred_check_branch
      %18 = sbr.rel (0) target = $region5
    $region4: #{tpu_custom_call.1} parent=1 // pred_region
      _
    $region5: #{tpu_custom_call.1} parent=1 // pred_fallthru
      _
    // Predicated region
    $region6: #{tpu_custom_call.1} parent=1 // pred_check
      _
    $region7: #{tpu_custom_call.1} parent=1 // pred_check_branch
      %20 = sbr.rel (0) target = $region9
    $region8: #{tpu_custom_call.1} parent=1 // pred_region
      _
    $region9: #{tpu_custom_call.1} parent=1 // pred_fallthru
      _
    // Predicated region
    $region10: #{tpu_custom_call.1} parent=1 // pred_check
      _
    $region11: #{tpu_custom_call.1} parent=1 // pred_check_branch
      %22 = sbr.rel (0) target = $region13
    $region12: #{tpu_custom_call.1} parent=1 // pred_region
      _
    $region13: #{tpu_custom_call.1} parent=1 // pred_fallthru
      _
    // Predicated region
    $region14: #{tpu_custom_call.1} parent=1 // pred_check
      _
    $region15: #{tpu_custom_call.1} parent=1 // pred_check_branch
      %24 = sbr.rel (0) target = $region17
    $region16: #{tpu_custom_call.1} parent=1 // pred_region
      _
    $region17: #{tpu_custom_call.1} parent=1 // pred_fallthru
      _
    // Predicated region
    $region18: #{tpu_custom_call.1} parent=1 // pred_check
      _
    $region19: #{tpu_custom_call.1} parent=1 // pred_check_branch
      %26 = sbr.rel (0) target = $region21
    $region20: #{tpu_custom_call.1} parent=1 // pred_region
      _
    $region21: #{tpu_custom_call.1} parent=1 // pred_fallthru
      _
    // Predicated region
    $region22: #{tpu_custom_call.1} parent=1 // pred_check
      _
    $region23: #{tpu_custom_call.1} parent=1 // pred_check_branch
      %28 = sbr.rel (0) target = $region25
    $region24: #{tpu_custom_call.1} parent=1 // pred_region
      _
    $region25: #{tpu_custom_call.1} parent=1 // pred_fallthru
      _
    // Predicated region
    $region26: #{tpu_custom_call.1} parent=1 // pred_check
      _
    $region27: #{tpu_custom_call.1} parent=1 // pred_check_branch
      %30 = sbr.rel (0) target = $region29
    $region28: #{tpu_custom_call.1} parent=1 // pred_region
      _
    $region29: #{tpu_custom_call.1} parent=1 // pred_fallthru
      _
    // Predicated region
    $region30: #{tpu_custom_call.1} parent=1 // pred_check
      _
    $region31: #{tpu_custom_call.1} parent=1 // pred_check_branch
      %32 = sbr.rel (0) target = $region33
    $region32: #{tpu_custom_call.1} parent=1 // pred_region
      _
    $region33: #{tpu_custom_call.1} parent=1 // pred_fallthru
      _
    // Predicated region
    $region34: #{tpu_custom_call.1} parent=1 // pred_check
      _
    $region35: #{tpu_custom_call.1} parent=1 // pred_check_branch
      %34 = sbr.rel (0) target = $region37
    $region36: #{tpu_custom_call.1} parent=1 // pred_region
      _
    $region37: #{tpu_custom_call.1} parent=1 // pred_fallthru
      _
    // Predicated region
    $region38: #{tpu_custom_call.1} parent=1 // pred_check
      _
    $region39: #{tpu_custom_call.1} parent=1 // pred_check_branch
      %36 = sbr.rel (0) target = $region41
    $region40: #{tpu_custom_call.1} parent=1 // pred_region
      _
    $region41: #{tpu_custom_call.1} parent=1 // pred_fallthru
      _
    // Predicated region
    $region42: #{tpu_custom_call.1} parent=1 // pred_check
      _
    $region43: #{tpu_custom_call.1} parent=1 // pred_check_branch
      %38 = sbr.rel (0) target = $region45
    $region44: #{tpu_custom_call.1} parent=1 // pred_region
      _
    $region45: #{tpu_custom_call.1} parent=1 // pred_fallthru
      _
    %p40 = scmp.eq.s32.totalorder 0, 0
    // Predicated region
    $region46: #{tpu_custom_call.1} parent=1 // pred_check
      %p41 = pneg %p40
    $region47: #{tpu_custom_call.1} parent=1 // pred_check_branch
      %43 = sbr.rel (%p41) target = $region49
    $region48: #{tpu_custom_call.1} parent=1 // pred_region
      %v44 = vld [vmem:[%s1] sm:$0xf]
      %v45 = vld [vmem:[%s5] sm:$0xf]
      %v46 = vld [vmem:[%s5 + $0x4] sm:$0xf]
      %v47 = vld [vmem:[%s5 + $0x8] sm:$0xf]
      %v48 = vld [vmem:[%s5 + $0xc] sm:$0xf]
      %v49 = vld [vmem:[%s5 + $0x10] sm:$0xf]
      %v50 = vld [vmem:[%s5 + $0x14] sm:$0xf]
      %v51 = vld [vmem:[%s5 + $0x18] sm:$0xf]
      %v52 = vld [vmem:[%s5 + $0x1c] sm:$0xf]
      %v53 = vld [vmem:[%s5 + $0x20] sm:$0xf]
      %v54 = vld [vmem:[%s5 + $0x24] sm:$0xf]
      %v55 = vld [vmem:[%s5 + $0x28] sm:$0xf]
      %v56 = vld [vmem:[%s5 + $0x2c] sm:$0xf]
      %v57 = vld [vmem:[%s5 + $0x30] sm:$0xf]
      %v58 = vld [vmem:[%s5 + $0x34] sm:$0xf]
      %v59 = vld [vmem:[%s5 + $0x38] sm:$0xf]
      %v60 = vld [vmem:[%s5 + $0x3c] sm:$0xf]
      %v61 = vld [vmem:[%s6] sm:$0x1]
      %v63 = vlaneseq
      %v64 = vshrl.u32 %v63, 7
      %v65 = vsub.s32 0, %v64
      %v66 = vrot.slane %v61, %v65
      %v84 = vunpack.c.l.b16 %v45
      %v85 = vunpack.c.l.b16 %v46
      %v86 = vunpack.c.l.b16 %v47
      %v87 = vunpack.c.l.b16 %v48
      %v88 = vunpack.c.l.b16 %v49
      %v89 = vunpack.c.l.b16 %v50
      %v90 = vunpack.c.l.b16 %v51
      %v91 = vunpack.c.l.b16 %v52
      %v92 = vunpack.c.l.b16 %v53
      %v93 = vunpack.c.l.b16 %v54
      %v94 = vunpack.c.l.b16 %v55
      %v95 = vunpack.c.l.b16 %v56
      %v96 = vunpack.c.l.b16 %v57
      %v97 = vunpack.c.l.b16 %v58
      %v98 = vunpack.c.l.b16 %v59
      %v99 = vunpack.c.l.b16 %v60
      %v100 = vpack.c.b16 %v85, %v84
      %v101 = vpack.c.b16 %v87, %v86
      %v102 = vpack.c.b16 %v89, %v88
      %v103 = vpack.c.b16 %v91, %v90
      %v104 = vpack.c.b16 %v93, %v92
      %v105 = vpack.c.b16 %v95, %v94
      %v106 = vpack.c.b16 %v97, %v96
      %v107 = vpack.c.b16 %v99, %v98
      %116 = vmatprep.subr.bf16.mxu0 0
      %117 = vmatpush1.bf16.msra.mxu0 %v100
      %118 = vmatprep.subr.bf16.mxu0 0
      %119 = vmatpush1.bf16.msra.mxu0 %v101
      %120 = vmatprep.subr.bf16.mxu0 0
      %121 = vmatpush1.bf16.msra.mxu0 %v102
      %122 = vmatprep.subr.bf16.mxu0 0
      %123 = vmatpush1.bf16.msra.mxu0 %v103
      %124 = vmatprep.subr.bf16.mxu0 0
      %125 = vmatpush1.bf16.msra.mxu0 %v104
      %126 = vmatprep.subr.bf16.mxu0 0
      %127 = vmatpush1.bf16.msra.mxu0 %v105
      %128 = vmatprep.subr.bf16.mxu0 0
      %129 = vmatpush1.bf16.msra.mxu0 %v106
      %130 = vmatprep.subr.bf16.mxu0 0
      %131 = vmatpush1.bf16.msra.mxu0 %v107
      %132 = vmatprep.subr.bf16.mxu0 0
      %133 = vmatpush1.bf16.msra.mxu0 0
      %134 = vmatprep.subr.bf16.mxu0 0
      %135 = vmatpush1.bf16.msra.mxu0 0
      %136 = vmatprep.subr.bf16.mxu0 0
      %137 = vmatpush1.bf16.msra.mxu0 0
      %138 = vmatprep.subr.bf16.mxu0 0
      %139 = vmatpush1.bf16.msra.mxu0 0
      %140 = vmatprep.subr.bf16.mxu0 0
      %141 = vmatpush1.bf16.msra.mxu0 0
      %142 = vmatprep.subr.bf16.mxu0 0
      %143 = vmatpush1.bf16.msra.mxu0 0
      %144 = vmatprep.subr.bf16.mxu0 0
      %145 = vmatpush1.bf16.msra.mxu0 0
      %146 = vmatprep.subr.bf16.mxu0 0
      %147 = vmatpush1.bf16.msra.mxu0 0
      %148 = vmatprep.mubr.bf16.mxu0 0
      %149 = vmatmul.mubr.bf16.gmra.mrb[0].mxu0 %v44
      %v150 = vpop.f32.mrb[0].mxu0
      %v151 = vadd.f32 %v66, %v150
      %v152 = vpop.f32.mrb[0].mxu0
      %v153 = vpop.f32.mrb[0].mxu0
      %v154 = vpop.f32.mrb[0].mxu0
      %155 = vdwg.mxu0
      %v156 = vld [vmem:[%s2] sm:$0xf]
      %v157 = vld [vmem:[%s7] sm:$0xf]
      %v158 = vld [vmem:[%s7 + $0x4] sm:$0xf]
      %v159 = vld [vmem:[%s7 + $0x8] sm:$0xf]
      %v160 = vld [vmem:[%s7 + $0xc] sm:$0xf]
      %v161 = vld [vmem:[%s7 + $0x10] sm:$0xf]
      %v162 = vld [vmem:[%s7 + $0x14] sm:$0xf]
      %v163 = vld [vmem:[%s7 + $0x18] sm:$0xf]
      %v164 = vld [vmem:[%s7 + $0x1c] sm:$0xf]
      %v165 = vld [vmem:[%s7 + $0x20] sm:$0xf]
      %v166 = vld [vmem:[%s7 + $0x24] sm:$0xf]
      %v167 = vld [vmem:[%s7 + $0x28] sm:$0xf]
      %v168 = vld [vmem:[%s7 + $0x2c] sm:$0xf]
      %v169 = vld [vmem:[%s7 + $0x30] sm:$0xf]
      %v170 = vld [vmem:[%s7 + $0x34] sm:$0xf]
      %v171 = vld [vmem:[%s7 + $0x38] sm:$0xf]
      %v172 = vld [vmem:[%s7 + $0x3c] sm:$0xf]
      %v173 = vld [vmem:[%s8] sm:$0x1]
      %v175 = vlaneseq
      %v176 = vshrl.u32 %v175, 7
      %v177 = vsub.s32 0, %v176
      %v178 = vrot.slane %v173, %v177
      %v196 = vunpack.c.l.b16 %v157
      %v197 = vunpack.c.l.b16 %v158
      %v198 = vunpack.c.l.b16 %v159
      %v199 = vunpack.c.l.b16 %v160
      %v200 = vunpack.c.l.b16 %v161
      %v201 = vunpack.c.l.b16 %v162
      %v202 = vunpack.c.l.b16 %v163
      %v203 = vunpack.c.l.b16 %v164
      %v204 = vunpack.c.l.b16 %v165
      %v205 = vunpack.c.l.b16 %v166
      %v206 = vunpack.c.l.b16 %v167
      %v207 = vunpack.c.l.b16 %v168
      %v208 = vunpack.c.l.b16 %v169
      %v209 = vunpack.c.l.b16 %v170
      %v210 = vunpack.c.l.b16 %v171
      %v211 = vunpack.c.l.b16 %v172
      %v212 = vpack.c.b16 %v197, %v196
      %v213 = vpack.c.b16 %v199, %v198
      %v214 = vpack.c.b16 %v201, %v200
      %v215 = vpack.c.b16 %v203, %v202
      %v216 = vpack.c.b16 %v205, %v204
      %v217 = vpack.c.b16 %v207, %v206
      %v218 = vpack.c.b16 %v209, %v208
      %v219 = vpack.c.b16 %v211, %v210
      %228 = vmatprep.subr.bf16.mxu0 0
      %229 = vmatpush1.bf16.msra.mxu0 %v212
      %230 = vmatprep.subr.bf16.mxu0 0
      %231 = vmatpush1.bf16.msra.mxu0 %v213
      %232 = vmatprep.subr.bf16.mxu0 0
      %233 = vmatpush1.bf16.msra.mxu0 %v214
      %234 = vmatprep.subr.bf16.mxu0 0
      %235 = vmatpush1.bf16.msra.mxu0 %v215
      %236 = vmatprep.subr.bf16.mxu0 0
      %237 = vmatpush1.bf16.msra.mxu0 %v216
      %238 = vmatprep.subr.bf16.mxu0 0
      %239 = vmatpush1.bf16.msra.mxu0 %v217
      %240 = vmatprep.subr.bf16.mxu0 0
      %241 = vmatpush1.bf16.msra.mxu0 %v218
      %242 = vmatprep.subr.bf16.mxu0 0
      %243 = vmatpush1.bf16.msra.mxu0 %v219
      %244 = vmatprep.subr.bf16.mxu0 0
      %245 = vmatpush1.bf16.msra.mxu0 0
      %246 = vmatprep.subr.bf16.mxu0 0
      %247 = vmatpush1.bf16.msra.mxu0 0
      %248 = vmatprep.subr.bf16.mxu0 0
      %249 = vmatpush1.bf16.msra.mxu0 0
      %250 = vmatprep.subr.bf16.mxu0 0
      %251 = vmatpush1.bf16.msra.mxu0 0
      %252 = vmatprep.subr.bf16.mxu0 0
      %253 = vmatpush1.bf16.msra.mxu0 0
      %254 = vmatprep.subr.bf16.mxu0 0
      %255 = vmatpush1.bf16.msra.mxu0 0
      %256 = vmatprep.subr.bf16.mxu0 0
      %257 = vmatpush1.bf16.msra.mxu0 0
      %258 = vmatprep.subr.bf16.mxu0 0
      %259 = vmatpush1.bf16.msra.mxu0 0
      %260 = vmatprep.mubr.bf16.mxu0 0
      %261 = vmatmul.mubr.bf16.gmra.mrb[0].mxu0 %v156
      %v262 = vpop.f32.mrb[0].mxu0
      %v263 = vadd.f32 %v178, %v262
      %v264 = vpop.f32.mrb[0].mxu0
      %v265 = vpop.f32.mrb[0].mxu0
      %v266 = vpop.f32.mrb[0].mxu0
      %267 = vdwg.mxu0
      %v268 = vpack.c.bf16 %v151, %v151
      %vm269 = vcmask 257024
      %270 = vst.msk [vmem:[#allocation2] sm:$0xf] %vm269, %v268
      %v271 = vpack.c.bf16 %v263, %v263
      %272 = vst.msk [vmem:[#allocation3] sm:$0xf] %vm269, %v271
    $region49: #{tpu_custom_call.1} parent=1 // pred_fallthru
      _
    %v273 = vld [vmem:[%s0] sm:$0xf]
    %v274 = vld [vmem:[%s0 + $0x4] sm:$0xf]
    %v275 = vld [vmem:[%s3] sm:$0xf]
    %v276 = vld [vmem:[%s3 + $0x4] sm:$0xf]
    %v277 = vld [vmem:[%s3 + $0x8] sm:$0xf]
    %v278 = vld [vmem:[%s3 + $0xc] sm:$0xf]
    %v279 = vld [vmem:[%s3 + $0x10] sm:$0xf]
    %v280 = vld [vmem:[%s3 + $0x14] sm:$0xf]
    %v281 = vld [vmem:[%s3 + $0x18] sm:$0xf]
    %v282 = vld [vmem:[%s3 + $0x1c] sm:$0xf]
    %v283 = vld [vmem:[%s3 + $0x20] sm:$0xf]
    %v284 = vld [vmem:[%s3 + $0x24] sm:$0xf]
    %v285 = vld [vmem:[%s3 + $0x28] sm:$0xf]
    %v286 = vld [vmem:[%s3 + $0x2c] sm:$0xf]
    %v287 = vld [vmem:[%s3 + $0x30] sm:$0xf]
    %v288 = vld [vmem:[%s3 + $0x34] sm:$0xf]
    %v289 = vld [vmem:[%s3 + $0x38] sm:$0xf]
    %v290 = vld [vmem:[%s3 + $0x3c] sm:$0xf]
    %v291 = vld [vmem:[%s4] sm:$0x1]
    %v293 = vlaneseq
    %v294 = vshrl.u32 %v293, 7
    %v295 = vsub.s32 0, %v294
    %v296 = vrot.slane %v291, %v295
    %v300 = vunpack.c.l.b16 %v273
    %v301 = vunpack.c.l.b16 %v274
    %v302 = vpack.c.b16 %v301, %v300
    %v320 = vunpack.c.l.b16 %v275
    %v321 = vunpack.c.l.b16 %v276
    %v322 = vunpack.c.l.b16 %v277
    %v323 = vunpack.c.l.b16 %v278
    %v324 = vunpack.c.l.b16 %v279
    %v325 = vunpack.c.l.b16 %v280
    %v326 = vunpack.c.l.b16 %v281
    %v327 = vunpack.c.l.b16 %v282
    %v328 = vunpack.c.l.b16 %v283
    %v329 = vunpack.c.l.b16 %v284
    %v330 = vunpack.c.l.b16 %v285
    %v331 = vunpack.c.l.b16 %v286
    %v332 = vunpack.c.l.b16 %v287
    %v333 = vunpack.c.l.b16 %v288
    %v334 = vunpack.c.l.b16 %v289
    %v335 = vunpack.c.l.b16 %v290
    %v336 = vpack.c.b16 %v321, %v320
    %v337 = vpack.c.b16 %v323, %v322
    %v338 = vpack.c.b16 %v325, %v324
    %v339 = vpack.c.b16 %v327, %v326
    %v340 = vpack.c.b16 %v329, %v328
    %v341 = vpack.c.b16 %v331, %v330
    %v342 = vpack.c.b16 %v333, %v332
    %v343 = vpack.c.b16 %v335, %v334
    %352 = vmatprep.subr.bf16.mxu0 0
    %353 = vmatpush1.bf16.msra.mxu0 %v336
    %354 = vmatprep.subr.bf16.mxu0 0
    %355 = vmatpush1.bf16.msra.mxu0 %v337
    %356 = vmatprep.subr.bf16.mxu0 0
    %357 = vmatpush1.bf16.msra.mxu0 %v338
    %358 = vmatprep.subr.bf16.mxu0 0
    %359 = vmatpush1.bf16.msra.mxu0 %v339
    %360 = vmatprep.subr.bf16.mxu0 0
    %361 = vmatpush1.bf16.msra.mxu0 %v340
    %362 = vmatprep.subr.bf16.mxu0 0
    %363 = vmatpush1.bf16.msra.mxu0 %v341
    %364 = vmatprep.subr.bf16.mxu0 0
    %365 = vmatpush1.bf16.msra.mxu0 %v342
    %366 = vmatprep.subr.bf16.mxu0 0
    %367 = vmatpush1.bf16.msra.mxu0 %v343
    %368 = vmatprep.subr.bf16.mxu0 0
    %369 = vmatpush1.bf16.msra.mxu0 0
    %370 = vmatprep.subr.bf16.mxu0 0
    %371 = vmatpush1.bf16.msra.mxu0 0
    %372 = vmatprep.subr.bf16.mxu0 0
    %373 = vmatpush1.bf16.msra.mxu0 0
    %374 = vmatprep.subr.bf16.mxu0 0
    %375 = vmatpush1.bf16.msra.mxu0 0
    %376 = vmatprep.subr.bf16.mxu0 0
    %377 = vmatpush1.bf16.msra.mxu0 0
    %378 = vmatprep.subr.bf16.mxu0 0
    %379 = vmatpush1.bf16.msra.mxu0 0
    %380 = vmatprep.subr.bf16.mxu0 0
    %381 = vmatpush1.bf16.msra.mxu0 0
    %382 = vmatprep.subr.bf16.mxu0 0
    %383 = vmatpush1.bf16.msra.mxu0 0
    %384 = vmatprep.mubr.bf16.mxu0 0
    %385 = vmatmul.mubr.bf16.gmra.mrb[0].mxu0 %v302
    %v386 = vpop.f32.mrb[0].mxu0
    %v387 = vadd.f32 %v296, %v386
    %v388 = vpop.f32.mrb[0].mxu0
    %v389 = vpop.f32.mrb[0].mxu0
    %v390 = vadd.f32 %v296, %v389
    %v391 = vpop.f32.mrb[0].mxu0
    %392 = vdwg.mxu0
    %v393 = vmul.f32 %v387, 0.35355338
    %v394 = vmul.f32 %v390, 0.35355338
    %397 = vrot.lane.b32.xlu0 %v393, 120
    %v398 = vpop.permute.xlu0 %397
    %399 = vrot.lane.b32.xlu0 %v394, 120
    %v400 = vpop.permute.xlu0 %399
    %403 = vrot.lane.b32.xlu0 %v393, 112
    %v404 = vpop.permute.xlu0 %403
    %405 = vrot.lane.b32.xlu0 %v394, 112
    %v406 = vpop.permute.xlu0 %405
    %409 = vrot.lane.b32.xlu0 %v393, 104
    %v410 = vpop.permute.xlu0 %409
    %411 = vrot.lane.b32.xlu0 %v394, 104
    %v412 = vpop.permute.xlu0 %411
    %v415 = vcombine.low %v393, %v404
    %v416 = vcombine.high %v393, %v404
    %v418 = vunpack.c.l.s4 1983009808
    %v419 = vunpack.c.0.s8 %v418
    %v420 = vlaneseq
    %v421 = vshrl.u32 %v420, 7
    %v422 = vsub.s32 %v419, %v421
    %v423 = vrot.slane %v415, %v422
    %v425 = vunpack.c.l.s4 1983009808
    %v426 = vunpack.c.0.s8 %v425
    %v427 = vlaneseq
    %v428 = vshrl.u32 %v427, 7
    %v429 = vsub.s32 %v426, %v428
    %v430 = vrot.slane %v416, %v429
    %v431 = vcombine.low %v398, %v410
    %v432 = vcombine.high %v398, %v410
    %v434 = vunpack.c.l.s4 1983009808
    %v435 = vunpack.c.0.s8 %v434
    %v436 = vlaneseq
    %v437 = vshrl.u32 %v436, 7
    %v438 = vsub.s32 %v435, %v437
    %v439 = vrot.slane %v431, %v438
    %v441 = vunpack.c.l.s4 1983009808
    %v442 = vunpack.c.0.s8 %v441
    %v443 = vlaneseq
    %v444 = vshrl.u32 %v443, 7
    %v445 = vsub.s32 %v442, %v444
    %v446 = vrot.slane %v432, %v445
    %v447 = vcombine.low %v423, %v439
    %v448 = vcombine.high %v423, %v439
    %v450 = vunpack.c.l.s4 1934713408
    %v451 = vunpack.c.0.s8 %v450
    %v452 = vlaneseq
    %v453 = vshrl.u32 %v452, 7
    %v454 = vsub.s32 %v451, %v453
    %v455 = vrot.slane %v447, %v454
    %v457 = vunpack.c.l.s4 1934713408
    %v458 = vunpack.c.0.s8 %v457
    %v459 = vlaneseq
    %v460 = vshrl.u32 %v459, 7
    %v461 = vsub.s32 %v458, %v460
    %v462 = vrot.slane %v448, %v461
    %v463 = vcombine.low %v430, %v446
    %v464 = vcombine.high %v430, %v446
    %v466 = vunpack.c.l.s4 1934713408
    %v467 = vunpack.c.0.s8 %v466
    %v468 = vlaneseq
    %v469 = vshrl.u32 %v468, 7
    %v470 = vsub.s32 %v467, %v469
    %v471 = vrot.slane %v463, %v470
    %v473 = vunpack.c.l.s4 1934713408
    %v474 = vunpack.c.0.s8 %v473
    %v475 = vlaneseq
    %v476 = vshrl.u32 %v475, 7
    %v477 = vsub.s32 %v474, %v476
    %v478 = vrot.slane %v464, %v477
    %v479 = vcombine.high %v455, 0.0
    %v480 = vcombine.high %v462, 0.0
    %v481 = vcombine.high %v471, 0.0
    %v482 = vcombine.high %v478, 0.0
    %v483 = vcombine.low %v394, %v406
    %v484 = vcombine.high %v394, %v406
    %v486 = vunpack.c.l.s4 1983009808
    %v487 = vunpack.c.0.s8 %v486
    %v488 = vlaneseq
    %v489 = vshrl.u32 %v488, 7
    %v490 = vsub.s32 %v487, %v489
    %v491 = vrot.slane %v483, %v490
    %v493 = vunpack.c.l.s4 1983009808
    %v494 = vunpack.c.0.s8 %v493
    %v495 = vlaneseq
    %v496 = vshrl.u32 %v495, 7
    %v497 = vsub.s32 %v494, %v496
    %v498 = vrot.slane %v484, %v497
    %v499 = vcombine.low %v400, %v412
    %v500 = vcombine.high %v400, %v412
    %v502 = vunpack.c.l.s4 1983009808
    %v503 = vunpack.c.0.s8 %v502
    %v504 = vlaneseq
    %v505 = vshrl.u32 %v504, 7
    %v506 = vsub.s32 %v503, %v505
    %v507 = vrot.slane %v499, %v506
    %v509 = vunpack.c.l.s4 1983009808
    %v510 = vunpack.c.0.s8 %v509
    %v511 = vlaneseq
    %v512 = vshrl.u32 %v511, 7
    %v513 = vsub.s32 %v510, %v512
    %v514 = vrot.slane %v500, %v513
    %v515 = vcombine.low %v491, %v507
    %v516 = vcombine.high %v491, %v507
    %v518 = vunpack.c.l.s4 1934713408
    %v519 = vunpack.c.0.s8 %v518
    %v520 = vlaneseq
    %v521 = vshrl.u32 %v520, 7
    %v522 = vsub.s32 %v519, %v521
    %v523 = vrot.slane %v515, %v522
    %v525 = vunpack.c.l.s4 1934713408
    %v526 = vunpack.c.0.s8 %v525
    %v527 = vlaneseq
    %v528 = vshrl.u32 %v527, 7
    %v529 = vsub.s32 %v526, %v528
    %v530 = vrot.slane %v516, %v529
    %v531 = vcombine.low %v498, %v514
    %v532 = vcombine.high %v498, %v514
    %v534 = vunpack.c.l.s4 1934713408
    %v535 = vunpack.c.0.s8 %v534
    %v536 = vlaneseq
    %v537 = vshrl.u32 %v536, 7
    %v538 = vsub.s32 %v535, %v537
    %v539 = vrot.slane %v531, %v538
    %v541 = vunpack.c.l.s4 1934713408
    %v542 = vunpack.c.0.s8 %v541
    %v543 = vlaneseq
    %v544 = vshrl.u32 %v543, 7
    %v545 = vsub.s32 %v542, %v544
    %v546 = vrot.slane %v532, %v545
    %v547 = vcombine.high %v523, 0.0
    %v548 = vcombine.high %v530, 0.0
    %v549 = vcombine.high %v539, 0.0
    %v550 = vcombine.high %v546, 0.0
    %v551 = vpack.c.bf16 %v455, %v455
    %v552 = vpack.c.bf16 %v479, %v479
    %v553 = vpack.c.bf16 %v462, %v462
    %v554 = vpack.c.bf16 %v480, %v480
    %v555 = vpack.c.bf16 %v471, %v471
    %v556 = vpack.c.bf16 %v481, %v481
    %v557 = vpack.c.bf16 %v478, %v478
    %v558 = vpack.c.bf16 %v482, %v482
    %v559 = vpack.c.bf16 %v523, %v523
    %v560 = vpack.c.bf16 %v547, %v547
    %v561 = vpack.c.bf16 %v530, %v530
    %v562 = vpack.c.bf16 %v548, %v548
    %v563 = vpack.c.bf16 %v539, %v539
    %v564 = vpack.c.bf16 %v549, %v549
    %v565 = vpack.c.bf16 %v546, %v546
    %v566 = vpack.c.bf16 %v550, %v550
    %v567 = vld [vmem:[#allocation2] sm:$0xf]
    %569 = vrot.lane.b32.xlu0 %v567, 120
    %v570 = vpop.permute.xlu0 %569
    %572 = vrot.lane.b32.xlu0 %v567, 112
    %v573 = vpop.permute.xlu0 %572
    %575 = vrot.lane.b32.xlu0 %v567, 104
    %v576 = vpop.permute.xlu0 %575
    %v578 = vld [vmem:[#allocation3] sm:$0xf]
    %580 = vrot.lane.b32.xlu0 %v578, 120
    %v581 = vpop.permute.xlu0 %580
    %583 = vrot.lane.b32.xlu0 %v578, 112
    %v584 = vpop.permute.xlu0 %583
    %586 = vrot.lane.b32.xlu0 %v578, 104
    %v587 = vpop.permute.xlu0 %586
    %v589 = vcombine.low %v551, %v555
    %v591 = vunpack.c.l.s4 1983009808
    %v592 = vunpack.c.0.s8 %v591
    %v593 = vlaneseq
    %v594 = vshrl.u32 %v593, 7
    %v595 = vsub.s32 %v592, %v594
    %v596 = vrot.slane %v589, %v595
    %v597 = vcombine.low %v553, %v557
    %v599 = vunpack.c.l.s4 1983009808
    %v600 = vunpack.c.0.s8 %v599
    %v601 = vlaneseq
    %v602 = vshrl.u32 %v601, 7
    %v603 = vsub.s32 %v600, %v602
    %v604 = vrot.slane %v597, %v603
    %v605 = vcombine.low %v559, %v563
    %v607 = vunpack.c.l.s4 1983009808
    %v608 = vunpack.c.0.s8 %v607
    %v609 = vlaneseq
    %v610 = vshrl.u32 %v609, 7
    %v611 = vsub.s32 %v608, %v610
    %v612 = vrot.slane %v605, %v611
    %v613 = vcombine.low %v561, %v565
    %v615 = vunpack.c.l.s4 1983009808
    %v616 = vunpack.c.0.s8 %v615
    %v617 = vlaneseq
    %v618 = vshrl.u32 %v617, 7
    %v619 = vsub.s32 %v616, %v618
    %v620 = vrot.slane %v613, %v619
    %v621 = vcombine.low %v596, %v604
    %v623 = vunpack.c.l.s4 1934713408
    %v624 = vunpack.c.0.s8 %v623
    %v625 = vlaneseq
    %v626 = vshrl.u32 %v625, 7
    %v627 = vsub.s32 %v624, %v626
    %v628 = vrot.slane %v621, %v627
    %v629 = vcombine.low %v612, %v620
    %v631 = vunpack.c.l.s4 1934713408
    %v632 = vunpack.c.0.s8 %v631
    %v633 = vlaneseq
    %v634 = vshrl.u32 %v633, 7
    %v635 = vsub.s32 %v632, %v634
    %v636 = vrot.slane %v629, %v635
    %v637 = vcombine.low %v628, %v636
    %v638 = vcombine.high %v628, %v636
    %v639 = vcombine.low %v552, %v556
    %v641 = vunpack.c.l.s4 1983009808
    %v642 = vunpack.c.0.s8 %v641
    %v643 = vlaneseq
    %v644 = vshrl.u32 %v643, 7
    %v645 = vsub.s32 %v642, %v644
    %v646 = vrot.slane %v639, %v645
    %v647 = vcombine.low %v554, %v558
    %v649 = vunpack.c.l.s4 1983009808
    %v650 = vunpack.c.0.s8 %v649
    %v651 = vlaneseq
    %v652 = vshrl.u32 %v651, 7
    %v653 = vsub.s32 %v650, %v652
    %v654 = vrot.slane %v647, %v653
    %v655 = vcombine.low %v560, %v564
    %v657 = vunpack.c.l.s4 1983009808
    %v658 = vunpack.c.0.s8 %v657
    %v659 = vlaneseq
    %v660 = vshrl.u32 %v659, 7
    %v661 = vsub.s32 %v658, %v660
    %v662 = vrot.slane %v655, %v661
    %v663 = vcombine.low %v562, %v566
    %v665 = vunpack.c.l.s4 1983009808
    %v666 = vunpack.c.0.s8 %v665
    %v667 = vlaneseq
    %v668 = vshrl.u32 %v667, 7
    %v669 = vsub.s32 %v666, %v668
    %v670 = vrot.slane %v663, %v669
    %v671 = vcombine.low %v646, %v654
    %v673 = vunpack.c.l.s4 1934713408
    %v674 = vunpack.c.0.s8 %v673
    %v675 = vlaneseq
    %v676 = vshrl.u32 %v675, 7
    %v677 = vsub.s32 %v674, %v676
    %v678 = vrot.slane %v671, %v677
    %v679 = vcombine.low %v662, %v670
    %v681 = vunpack.c.l.s4 1934713408
    %v682 = vunpack.c.0.s8 %v681
    %v683 = vlaneseq
    %v684 = vshrl.u32 %v683, 7
    %v685 = vsub.s32 %v682, %v684
    %v686 = vrot.slane %v679, %v685
    %v687 = vcombine.low %v678, %v686
    %v688 = vcombine.high %v678, %v686
    %v691 = vpack.i.b16 %v687, %v637
    %v692 = vshrl.u32 %v637, 16
    %v693 = vshrl.u32 %v687, 16
    %v694 = vpack.i.b16 %v693, %v692
    %v697 = vpack.i.b16 %v688, %v638
    %v698 = vshrl.u32 %v638, 16
    %v699 = vshrl.u32 %v688, 16
    %v700 = vpack.i.b16 %v699, %v698
    %701 = vxpose.xlu0.c.b16.start [1/8] %v567, 128
    %702 = vxpose.xlu0.c.b16.cont [2/8] 0, 128
    %703 = vxpose.xlu0.c.b16.cont [3/8] 0, 128
    %704 = vxpose.xlu0.c.b16.cont [4/8] 0, 128
    %705 = vxpose.xlu0.c.b16.cont [5/8] 0, 128
    %706 = vxpose.xlu0.c.b16.cont [6/8] 0, 128
    %707 = vxpose.xlu0.c.b16.cont [7/8] 0, 128
    %708 = vxpose.xlu0.c.b16.end [8/8] 0, 128
    %v709 = vpop.trf.xlu0
    %v710 = vpop.trf.xlu0
    %v711 = vpop.trf.xlu0
    %v712 = vpop.trf.xlu0
    %v713 = vpop.trf.xlu0
    %v714 = vpop.trf.xlu0
    %v715 = vpop.trf.xlu0
    %v716 = vpop.trf.xlu0
    %717 = vxpose.xlu0.c.b16.start [1/8] %v570, 128
    %718 = vxpose.xlu0.c.b16.cont [2/8] 0, 128
    %719 = vxpose.xlu0.c.b16.cont [3/8] 0, 128
    %720 = vxpose.xlu0.c.b16.cont [4/8] 0, 128
    %721 = vxpose.xlu0.c.b16.cont [5/8] 0, 128
    %722 = vxpose.xlu0.c.b16.cont [6/8] 0, 128
    %723 = vxpose.xlu0.c.b16.cont [7/8] 0, 128
    %724 = vxpose.xlu0.c.b16.end [8/8] 0, 128
    %v725 = vpop.trf.xlu0
    %v726 = vpop.trf.xlu0
    %v727 = vpop.trf.xlu0
    %v728 = vpop.trf.xlu0
    %v729 = vpop.trf.xlu0
    %v730 = vpop.trf.xlu0
    %v731 = vpop.trf.xlu0
    %v732 = vpop.trf.xlu0
    %733 = vxpose.xlu0.c.b16.start [1/8] %v573, 128
    %734 = vxpose.xlu0.c.b16.cont [2/8] 0, 128
    %735 = vxpose.xlu0.c.b16.cont [3/8] 0, 128
    %736 = vxpose.xlu0.c.b16.cont [4/8] 0, 128
    %737 = vxpose.xlu0.c.b16.cont [5/8] 0, 128
    %738 = vxpose.xlu0.c.b16.cont [6/8] 0, 128
    %739 = vxpose.xlu0.c.b16.cont [7/8] 0, 128
    %740 = vxpose.xlu0.c.b16.end [8/8] 0, 128
    %v741 = vpop.trf.xlu0
    %v742 = vpop.trf.xlu0
    %v743 = vpop.trf.xlu0
    %v744 = vpop.trf.xlu0
    %v745 = vpop.trf.xlu0
    %v746 = vpop.trf.xlu0
    %v747 = vpop.trf.xlu0
    %v748 = vpop.trf.xlu0
    %749 = vxpose.xlu0.c.b16.start [1/8] %v576, 128
    %750 = vxpose.xlu0.c.b16.cont [2/8] 0, 128
    %751 = vxpose.xlu0.c.b16.cont [3/8] 0, 128
    %752 = vxpose.xlu0.c.b16.cont [4/8] 0, 128
    %753 = vxpose.xlu0.c.b16.cont [5/8] 0, 128
    %754 = vxpose.xlu0.c.b16.cont [6/8] 0, 128
    %755 = vxpose.xlu0.c.b16.cont [7/8] 0, 128
    %756 = vxpose.xlu0.c.b16.end [8/8] 0, 128
    %v757 = vpop.trf.xlu0
    %v758 = vpop.trf.xlu0
    %v759 = vpop.trf.xlu0
    %v760 = vpop.trf.xlu0
    %v761 = vpop.trf.xlu0
    %v762 = vpop.trf.xlu0
    %v763 = vpop.trf.xlu0
    %v764 = vpop.trf.xlu0
    %vm765 = vcmask 64512
    %v767 = vsel %vm765, %v691, 0
    %vm769 = vcmask 1043456
    %v771 = vsel %vm769, %v709, 0
    %773 = vmatprep.subr.bf16.mxu0 0
    %774 = vmatpush1.bf16.msra.mxu0 %v771
    %775 = vmatprep.subr.bf16.mxu0 0
    %776 = vmatpush1.bf16.msra.mxu0 0
    %777 = vmatprep.subr.bf16.mxu0 0
    %778 = vmatpush1.bf16.msra.mxu0 0
    %779 = vmatprep.subr.bf16.mxu0 0
    %780 = vmatpush1.bf16.msra.mxu0 0
    %781 = vmatprep.subr.bf16.mxu0 0
    %782 = vmatpush1.bf16.msra.mxu0 0
    %783 = vmatprep.subr.bf16.mxu0 0
    %784 = vmatpush1.bf16.msra.mxu0 0
    %785 = vmatprep.subr.bf16.mxu0 0
    %786 = vmatpush1.bf16.msra.mxu0 0
    %787 = vmatprep.subr.bf16.mxu0 0
    %788 = vmatpush1.bf16.msra.mxu0 0
    %789 = vmatprep.subr.bf16.mxu0 0
    %790 = vmatpush1.bf16.msra.mxu0 0
    %791 = vmatprep.subr.bf16.mxu0 0
    %792 = vmatpush1.bf16.msra.mxu0 0
    %793 = vmatprep.subr.bf16.mxu0 0
    %794 = vmatpush1.bf16.msra.mxu0 0
    %795 = vmatprep.subr.bf16.mxu0 0
    %796 = vmatpush1.bf16.msra.mxu0 0
    %797 = vmatprep.subr.bf16.mxu0 0
    %798 = vmatpush1.bf16.msra.mxu0 0
    %799 = vmatprep.subr.bf16.mxu0 0
    %800 = vmatpush1.bf16.msra.mxu0 0
    %801 = vmatprep.subr.bf16.mxu0 0
    %802 = vmatpush1.bf16.msra.mxu0 0
    %803 = vmatprep.subr.bf16.mxu0 0
    %804 = vmatpush1.bf16.msra.mxu0 0
    %805 = vmatprep.mubr.bf16.mxu0 0
    %806 = vmatmul.mubr.bf16.gmra.mrb[0].mxu0 %v767
    %v807 = vpop.f32.mrb[0].mxu0
    %v808 = vadd.f32 0.0, %v807
    %v809 = vpop.f32.mrb[0].mxu0
    %v810 = vpop.f32.mrb[0].mxu0
    %v811 = vadd.f32 0.0, %v810
    %v812 = vpop.f32.mrb[0].mxu0
    %813 = vdwg.mxu0
    %v815 = vsel %vm765, %v694, 0
    %v818 = vsel %vm769, %v725, 0
    %820 = vmatprep.subr.bf16.mxu0 0
    %821 = vmatpush1.bf16.msra.mxu0 %v818
    %822 = vmatprep.subr.bf16.mxu0 0
    %823 = vmatpush1.bf16.msra.mxu0 0
    %824 = vmatprep.subr.bf16.mxu0 0
    %825 = vmatpush1.bf16.msra.mxu0 0
    %826 = vmatprep.subr.bf16.mxu0 0
    %827 = vmatpush1.bf16.msra.mxu0 0
    %828 = vmatprep.subr.bf16.mxu0 0
    %829 = vmatpush1.bf16.msra.mxu0 0
    %830 = vmatprep.subr.bf16.mxu0 0
    %831 = vmatpush1.bf16.msra.mxu0 0
    %832 = vmatprep.subr.bf16.mxu0 0
    %833 = vmatpush1.bf16.msra.mxu0 0
    %834 = vmatprep.subr.bf16.mxu0 0
    %835 = vmatpush1.bf16.msra.mxu0 0
    %836 = vmatprep.subr.bf16.mxu0 0
    %837 = vmatpush1.bf16.msra.mxu0 0
    %838 = vmatprep.subr.bf16.mxu0 0
    %839 = vmatpush1.bf16.msra.mxu0 0
    %840 = vmatprep.subr.bf16.mxu0 0
    %841 = vmatpush1.bf16.msra.mxu0 0
    %842 = vmatprep.subr.bf16.mxu0 0
    %843 = vmatpush1.bf16.msra.mxu0 0
    %844 = vmatprep.subr.bf16.mxu0 0
    %845 = vmatpush1.bf16.msra.mxu0 0
    %846 = vmatprep.subr.bf16.mxu0 0
    %847 = vmatpush1.bf16.msra.mxu0 0
    %848 = vmatprep.subr.bf16.mxu0 0
    %849 = vmatpush1.bf16.msra.mxu0 0
    %850 = vmatprep.subr.bf16.mxu0 0
    %851 = vmatpush1.bf16.msra.mxu0 0
    %852 = vmatprep.mubr.bf16.mxu0 0
    %853 = vmatmul.mubr.bf16.gmra.mrb[0].mxu0 %v815
    %v854 = vpop.f32.mrb[0].mxu0
    %v855 = vadd.f32 0.0, %v854
    %v856 = vpop.f32.mrb[0].mxu0
    %v857 = vpop.f32.mrb[0].mxu0
    %v858 = vadd.f32 0.0, %v857
    %v859 = vpop.f32.mrb[0].mxu0
    %860 = vdwg.mxu0
    %v862 = vsel %vm765, %v697, 0
    %v865 = vsel %vm769, %v741, 0
    %867 = vmatprep.subr.bf16.mxu0 0
    %868 = vmatpush1.bf16.msra.mxu0 %v865
    %869 = vmatprep.subr.bf16.mxu0 0
    %870 = vmatpush1.bf16.msra.mxu0 0
    %871 = vmatprep.subr.bf16.mxu0 0
    %872 = vmatpush1.bf16.msra.mxu0 0
    %873 = vmatprep.subr.bf16.mxu0 0
    %874 = vmatpush1.bf16.msra.mxu0 0
    %875 = vmatprep.subr.bf16.mxu0 0
    %876 = vmatpush1.bf16.msra.mxu0 0
    %877 = vmatprep.subr.bf16.mxu0 0
    %878 = vmatpush1.bf16.msra.mxu0 0
    %879 = vmatprep.subr.bf16.mxu0 0
    %880 = vmatpush1.bf16.msra.mxu0 0
    %881 = vmatprep.subr.bf16.mxu0 0
    %882 = vmatpush1.bf16.msra.mxu0 0
    %883 = vmatprep.subr.bf16.mxu0 0
    %884 = vmatpush1.bf16.msra.mxu0 0
    %885 = vmatprep.subr.bf16.mxu0 0
    %886 = vmatpush1.bf16.msra.mxu0 0
    %887 = vmatprep.subr.bf16.mxu0 0
    %888 = vmatpush1.bf16.msra.mxu0 0
    %889 = vmatprep.subr.bf16.mxu0 0
    %890 = vmatpush1.bf16.msra.mxu0 0
    %891 = vmatprep.subr.bf16.mxu0 0
    %892 = vmatpush1.bf16.msra.mxu0 0
    %893 = vmatprep.subr.bf16.mxu0 0
    %894 = vmatpush1.bf16.msra.mxu0 0
    %895 = vmatprep.subr.bf16.mxu0 0
    %896 = vmatpush1.bf16.msra.mxu0 0
    %897 = vmatprep.subr.bf16.mxu0 0
    %898 = vmatpush1.bf16.msra.mxu0 0
    %899 = vmatprep.mubr.bf16.mxu0 0
    %900 = vmatmul.mubr.bf16.gmra.mrb[0].mxu0 %v862
    %v901 = vpop.f32.mrb[0].mxu0
    %v902 = vadd.f32 0.0, %v901
    %v903 = vpop.f32.mrb[0].mxu0
    %v904 = vpop.f32.mrb[0].mxu0
    %v905 = vadd.f32 0.0, %v904
    %v906 = vpop.f32.mrb[0].mxu0
    %907 = vdwg.mxu0
    %v909 = vsel %vm765, %v700, 0
    %v912 = vsel %vm769, %v757, 0
    %914 = vmatprep.subr.bf16.mxu0 0
    %915 = vmatpush1.bf16.msra.mxu0 %v912
    %916 = vmatprep.subr.bf16.mxu0 0
    %917 = vmatpush1.bf16.msra.mxu0 0
    %918 = vmatprep.subr.bf16.mxu0 0
    %919 = vmatpush1.bf16.msra.mxu0 0
    %920 = vmatprep.subr.bf16.mxu0 0
    %921 = vmatpush1.bf16.msra.mxu0 0
    %922 = vmatprep.subr.bf16.mxu0 0
    %923 = vmatpush1.bf16.msra.mxu0 0
    %924 = vmatprep.subr.bf16.mxu0 0
    %925 = vmatpush1.bf16.msra.mxu0 0
    %926 = vmatprep.subr.bf16.mxu0 0
    %927 = vmatpush1.bf16.msra.mxu0 0
    %928 = vmatprep.subr.bf16.mxu0 0
    %929 = vmatpush1.bf16.msra.mxu0 0
    %930 = vmatprep.subr.bf16.mxu0 0
    %931 = vmatpush1.bf16.msra.mxu0 0
    %932 = vmatprep.subr.bf16.mxu0 0
    %933 = vmatpush1.bf16.msra.mxu0 0
    %934 = vmatprep.subr.bf16.mxu0 0
    %935 = vmatpush1.bf16.msra.mxu0 0
    %936 = vmatprep.subr.bf16.mxu0 0
    %937 = vmatpush1.bf16.msra.mxu0 0
    %938 = vmatprep.subr.bf16.mxu0 0
    %939 = vmatpush1.bf16.msra.mxu0 0
    %940 = vmatprep.subr.bf16.mxu0 0
    %941 = vmatpush1.bf16.msra.mxu0 0
    %942 = vmatprep.subr.bf16.mxu0 0
    %943 = vmatpush1.bf16.msra.mxu0 0
    %944 = vmatprep.subr.bf16.mxu0 0
    %945 = vmatpush1.bf16.msra.mxu0 0
    %946 = vmatprep.mubr.bf16.mxu0 0
    %947 = vmatmul.mubr.bf16.gmra.mrb[0].mxu0 %v909
    %v948 = vpop.f32.mrb[0].mxu0
    %v949 = vadd.f32 0.0, %v948
    %v950 = vpop.f32.mrb[0].mxu0
    %v951 = vpop.f32.mrb[0].mxu0
    %v952 = vadd.f32 0.0, %v951
    %v953 = vpop.f32.mrb[0].mxu0
    %954 = vdwg.mxu0
    %v955 = vsel %vm765, %v808, -inf
    %956 = vmax.xlane.f32.xlu0 %v955
    %v957 = vpop.xlane.xlu0 %956
    %v958 = vsel %vm765, %v811, -inf
    %959 = vmax.xlane.f32.xlu0 %v958
    %v960 = vpop.xlane.xlu0 %959
    %v961 = vsel %vm765, %v855, -inf
    %962 = vmax.xlane.f32.xlu0 %v961
    %v963 = vpop.xlane.xlu0 %962
    %v964 = vsel %vm765, %v858, -inf
    %965 = vmax.xlane.f32.xlu0 %v964
    %v966 = vpop.xlane.xlu0 %965
    %v967 = vsel %vm765, %v902, -inf
    %968 = vmax.xlane.f32.xlu0 %v967
    %v969 = vpop.xlane.xlu0 %968
    %v970 = vsel %vm765, %v905, -inf
    %971 = vmax.xlane.f32.xlu0 %v970
    %v972 = vpop.xlane.xlu0 %971
    %v973 = vsel %vm765, %v949, -inf
    %974 = vmax.xlane.f32.xlu0 %v973
    %v975 = vpop.xlane.xlu0 %974
    %v976 = vsel %vm765, %v952, -inf
    %977 = vmax.xlane.f32.xlu0 %v976
    %v978 = vpop.xlane.xlu0 %977
    %v979 = vsub.f32 %v808, %v957
    %v980 = vsub.f32 %v811, %v960
    %v981 = vsub.f32 %v855, %v963
    %v982 = vsub.f32 %v858, %v966
    %v983 = vsub.f32 %v902, %v969
    %v984 = vsub.f32 %v905, %v972
    %v985 = vsub.f32 %v949, %v975
    %v986 = vsub.f32 %v952, %v978
    %v987 = vmul.f32 %v979, 1.442695
    %v988 = vpow.pop %v987
    %v989 = vmul.f32 %v980, 1.442695
    %v990 = vpow.pop %v989
    %v991 = vmul.f32 %v981, 1.442695
    %v992 = vpow.pop %v991
    %v993 = vmul.f32 %v982, 1.442695
    %v994 = vpow.pop %v993
    %v995 = vmul.f32 %v983, 1.442695
    %v996 = vpow.pop %v995
    %v997 = vmul.f32 %v984, 1.442695
    %v998 = vpow.pop %v997
    %v999 = vmul.f32 %v985, 1.442695
    %v1000 = vpow.pop %v999
    %v1001 = vmul.f32 %v986, 1.442695
    %v1002 = vpow.pop %v1001
    %v1003 = vsel %vm765, %v988, 0.0
    %1004 = vadd.xlane.f32.xlu0 %v1003
    %v1005 = vpop.xlane.xlu0 %1004
    %v1006 = vsel %vm765, %v990, 0.0
    %1007 = vadd.xlane.f32.xlu0 %v1006
    %v1008 = vpop.xlane.xlu0 %1007
    %v1009 = vsel %vm765, %v992, 0.0
    %1010 = vadd.xlane.f32.xlu0 %v1009
    %v1011 = vpop.xlane.xlu0 %1010
    %v1012 = vsel %vm765, %v994, 0.0
    %1013 = vadd.xlane.f32.xlu0 %v1012
    %v1014 = vpop.xlane.xlu0 %1013
    %v1015 = vsel %vm765, %v996, 0.0
    %1016 = vadd.xlane.f32.xlu0 %v1015
    %v1017 = vpop.xlane.xlu0 %1016
    %v1018 = vsel %vm765, %v998, 0.0
    %1019 = vadd.xlane.f32.xlu0 %v1018
    %v1020 = vpop.xlane.xlu0 %1019
    %v1021 = vsel %vm765, %v1000, 0.0
    %1022 = vadd.xlane.f32.xlu0 %v1021
    %v1023 = vpop.xlane.xlu0 %1022
    %v1024 = vsel %vm765, %v1002, 0.0
    %1025 = vadd.xlane.f32.xlu0 %v1024
    %v1026 = vpop.xlane.xlu0 %1025
    %v1027 = vrcp.pop %v1005
    %v1028 = vrcp.pop %v1008
    %v1029 = vrcp.pop %v1011
    %v1030 = vrcp.pop %v1014
    %v1031 = vrcp.pop %v1017
    %v1032 = vrcp.pop %v1020
    %v1033 = vrcp.pop %v1023
    %v1034 = vrcp.pop %v1026
    %v1035 = vmul.f32 %v988, %v1027
    %v1036 = vmul.f32 %v990, %v1028
    %v1037 = vmul.f32 %v992, %v1029
    %v1038 = vmul.f32 %v994, %v1030
    %v1039 = vmul.f32 %v996, %v1031
    %v1040 = vmul.f32 %v998, %v1032
    %v1041 = vmul.f32 %v1000, %v1033
    %v1042 = vmul.f32 %v1002, %v1034
    %v1043 = vpack.c.bf16 %v1036, %v1035
    %v1044 = vpack.c.bf16 %v1038, %v1037
    %v1045 = vpack.c.bf16 %v1040, %v1039
    %v1046 = vpack.c.bf16 %v1042, %v1041
    %1047 = vxpose.xlu0.c.b16.start [1/8] %v578, 128
    %1048 = vxpose.xlu0.c.b16.cont [2/8] 0, 128
    %1049 = vxpose.xlu0.c.b16.cont [3/8] 0, 128
    %1050 = vxpose.xlu0.c.b16.cont [4/8] 0, 128
    %1051 = vxpose.xlu0.c.b16.cont [5/8] 0, 128
    %1052 = vxpose.xlu0.c.b16.cont [6/8] 0, 128
    %1053 = vxpose.xlu0.c.b16.cont [7/8] 0, 128
    %1054 = vxpose.xlu0.c.b16.end [8/8] 0, 128
    %v1055 = vpop.trf.xlu0
    %v1056 = vpop.trf.xlu0
    %v1057 = vpop.trf.xlu0
    %v1058 = vpop.trf.xlu0
    %v1059 = vpop.trf.xlu0
    %v1060 = vpop.trf.xlu0
    %v1061 = vpop.trf.xlu0
    %v1062 = vpop.trf.xlu0
    %1063 = vxpose.xlu0.c.b16.start [1/8] %v581, 128
    %1064 = vxpose.xlu0.c.b16.cont [2/8] 0, 128
    %1065 = vxpose.xlu0.c.b16.cont [3/8] 0, 128
    %1066 = vxpose.xlu0.c.b16.cont [4/8] 0, 128
    %1067 = vxpose.xlu0.c.b16.cont [5/8] 0, 128
    %1068 = vxpose.xlu0.c.b16.cont [6/8] 0, 128
    %1069 = vxpose.xlu0.c.b16.cont [7/8] 0, 128
    %1070 = vxpose.xlu0.c.b16.end [8/8] 0, 128
    %v1071 = vpop.trf.xlu0
    %v1072 = vpop.trf.xlu0
    %v1073 = vpop.trf.xlu0
    %v1074 = vpop.trf.xlu0
    %v1075 = vpop.trf.xlu0
    %v1076 = vpop.trf.xlu0
    %v1077 = vpop.trf.xlu0
    %v1078 = vpop.trf.xlu0
    %1079 = vxpose.xlu0.c.b16.start [1/8] %v584, 128
    %1080 = vxpose.xlu0.c.b16.cont [2/8] 0, 128
    %1081 = vxpose.xlu0.c.b16.cont [3/8] 0, 128
    %1082 = vxpose.xlu0.c.b16.cont [4/8] 0, 128
    %1083 = vxpose.xlu0.c.b16.cont [5/8] 0, 128
    %1084 = vxpose.xlu0.c.b16.cont [6/8] 0, 128
    %1085 = vxpose.xlu0.c.b16.cont [7/8] 0, 128
    %1086 = vxpose.xlu0.c.b16.end [8/8] 0, 128
    %v1087 = vpop.trf.xlu0
    %v1088 = vpop.trf.xlu0
    %v1089 = vpop.trf.xlu0
    %v1090 = vpop.trf.xlu0
    %v1091 = vpop.trf.xlu0
    %v1092 = vpop.trf.xlu0
    %v1093 = vpop.trf.xlu0
    %v1094 = vpop.trf.xlu0
    %1095 = vxpose.xlu0.c.b16.start [1/8] %v587, 128
    %1096 = vxpose.xlu0.c.b16.cont [2/8] 0, 128
    %1097 = vxpose.xlu0.c.b16.cont [3/8] 0, 128
    %1098 = vxpose.xlu0.c.b16.cont [4/8] 0, 128
    %1099 = vxpose.xlu0.c.b16.cont [5/8] 0, 128
    %1100 = vxpose.xlu0.c.b16.cont [6/8] 0, 128
    %1101 = vxpose.xlu0.c.b16.cont [7/8] 0, 128
    %1102 = vxpose.xlu0.c.b16.end [8/8] 0, 128
    %v1103 = vpop.trf.xlu0
    %v1104 = vpop.trf.xlu0
    %v1105 = vpop.trf.xlu0
    %v1106 = vpop.trf.xlu0
    %v1107 = vpop.trf.xlu0
    %v1108 = vpop.trf.xlu0
    %v1109 = vpop.trf.xlu0
    %v1110 = vpop.trf.xlu0
    %v1112 = vsel %vm765, %v1055, 0
    %v1115 = vsel %vm765, %v1043, 0
    %1117 = vmatprep.subr.bf16.mxu0 0
    %1118 = vmatpush1.bf16.xpose.msra.mxu0 %v1115
    %1119 = vmatprep.subr.bf16.mxu0 0
    %1120 = vmatpush1.bf16.xpose.msra.mxu0 0
    %1121 = vmatprep.subr.bf16.mxu0 0
    %1122 = vmatpush1.bf16.xpose.msra.mxu0 0
    %1123 = vmatprep.subr.bf16.mxu0 0
    %1124 = vmatpush1.bf16.xpose.msra.mxu0 0
    %1125 = vmatprep.subr.bf16.mxu0 0
    %1126 = vmatpush1.bf16.xpose.msra.mxu0 0
    %1127 = vmatprep.subr.bf16.mxu0 0
    %1128 = vmatpush1.bf16.xpose.msra.mxu0 0
    %1129 = vmatprep.subr.bf16.mxu0 0
    %1130 = vmatpush1.bf16.xpose.msra.mxu0 0
    %1131 = vmatprep.subr.bf16.mxu0 0
    %1132 = vmatpush1.bf16.xpose.msra.mxu0 0
    %1133 = vmatprep.subr.bf16.mxu0 0
    %1134 = vmatpush1.bf16.xpose.msra.mxu0 0
    %1135 = vmatprep.subr.bf16.mxu0 0
    %1136 = vmatpush1.bf16.xpose.msra.mxu0 0
    %1137 = vmatprep.subr.bf16.mxu0 0
    %1138 = vmatpush1.bf16.xpose.msra.mxu0 0
    %1139 = vmatprep.subr.bf16.mxu0 0
    %1140 = vmatpush1.bf16.xpose.msra.mxu0 0
    %1141 = vmatprep.subr.bf16.mxu0 0
    %1142 = vmatpush1.bf16.xpose.msra.mxu0 0
    %1143 = vmatprep.subr.bf16.mxu0 0
    %1144 = vmatpush1.bf16.xpose.msra.mxu0 0
    %1145 = vmatprep.subr.bf16.mxu0 0
    %1146 = vmatpush1.bf16.xpose.msra.mxu0 0
    %1147 = vmatprep.subr.bf16.mxu0 0
    %1148 = vmatpush1.bf16.xpose.msra.mxu0 0
    %1149 = vmatprep.mubr.bf16.mxu0 0
    %1150 = vmatmul.mubr.bf16.gmra.mrb[0].mxu0 %v1112
    %v1151 = vpop.f32.mrb[0].mxu0
    %v1152 = vadd.f32 0.0, %v1151
    %v1153 = vpop.f32.mrb[0].mxu0
    %v1154 = vpop.f32.mrb[0].mxu0
    %v1155 = vpop.f32.mrb[0].mxu0
    %1156 = vdwg.mxu0
    %v1158 = vsel %vm765, %v1071, 0
    %v1161 = vsel %vm765, %v1044, 0
    %1163 = vmatprep.subr.bf16.mxu0 0
    %1164 = vmatpush1.bf16.xpose.msra.mxu0 %v1161
    %1165 = vmatprep.subr.bf16.mxu0 0
    %1166 = vmatpush1.bf16.xpose.msra.mxu0 0
    %1167 = vmatprep.subr.bf16.mxu0 0
    %1168 = vmatpush1.bf16.xpose.msra.mxu0 0
    %1169 = vmatprep.subr.bf16.mxu0 0
    %1170 = vmatpush1.bf16.xpose.msra.mxu0 0
    %1171 = vmatprep.subr.bf16.mxu0 0
    %1172 = vmatpush1.bf16.xpose.msra.mxu0 0
    %1173 = vmatprep.subr.bf16.mxu0 0
    %1174 = vmatpush1.bf16.xpose.msra.mxu0 0
    %1175 = vmatprep.subr.bf16.mxu0 0
    %1176 = vmatpush1.bf16.xpose.msra.mxu0 0
    %1177 = vmatprep.subr.bf16.mxu0 0
    %1178 = vmatpush1.bf16.xpose.msra.mxu0 0
    %1179 = vmatprep.subr.bf16.mxu0 0
    %1180 = vmatpush1.bf16.xpose.msra.mxu0 0
    %1181 = vmatprep.subr.bf16.mxu0 0
    %1182 = vmatpush1.bf16.xpose.msra.mxu0 0
    %1183 = vmatprep.subr.bf16.mxu0 0
    %1184 = vmatpush1.bf16.xpose.msra.mxu0 0
    %1185 = vmatprep.subr.bf16.mxu0 0
    %1186 = vmatpush1.bf16.xpose.msra.mxu0 0
    %1187 = vmatprep.subr.bf16.mxu0 0
    %1188 = vmatpush1.bf16.xpose.msra.mxu0 0
    %1189 = vmatprep.subr.bf16.mxu0 0
    %1190 = vmatpush1.bf16.xpose.msra.mxu0 0
    %1191 = vmatprep.subr.bf16.mxu0 0
    %1192 = vmatpush1.bf16.xpose.msra.mxu0 0
    %1193 = vmatprep.subr.bf16.mxu0 0
    %1194 = vmatpush1.bf16.xpose.msra.mxu0 0
    %1195 = vmatprep.mubr.bf16.mxu0 0
    %1196 = vmatmul.mubr.bf16.gmra.mrb[0].mxu0 %v1158
    %v1197 = vpop.f32.mrb[0].mxu0
    %v1198 = vadd.f32 0.0, %v1197
    %v1199 = vpop.f32.mrb[0].mxu0
    %v1200 = vpop.f32.mrb[0].mxu0
    %v1201 = vpop.f32.mrb[0].mxu0
    %1202 = vdwg.mxu0
    %v1204 = vsel %vm765, %v1087, 0
    %v1207 = vsel %vm765, %v1045, 0
    %1209 = vmatprep.subr.bf16.mxu0 0
    %1210 = vmatpush1.bf16.xpose.msra.mxu0 %v1207
    %1211 = vmatprep.subr.bf16.mxu0 0
    %1212 = vmatpush1.bf16.xpose.msra.mxu0 0
    %1213 = vmatprep.subr.bf16.mxu0 0
    %1214 = vmatpush1.bf16.xpose.msra.mxu0 0
    %1215 = vmatprep.subr.bf16.mxu0 0
    %1216 = vmatpush1.bf16.xpose.msra.mxu0 0
    %1217 = vmatprep.subr.bf16.mxu0 0
    %1218 = vmatpush1.bf16.xpose.msra.mxu0 0
    %1219 = vmatprep.subr.bf16.mxu0 0
    %1220 = vmatpush1.bf16.xpose.msra.mxu0 0
    %1221 = vmatprep.subr.bf16.mxu0 0
    %1222 = vmatpush1.bf16.xpose.msra.mxu0 0
    %1223 = vmatprep.subr.bf16.mxu0 0
    %1224 = vmatpush1.bf16.xpose.msra.mxu0 0
    %1225 = vmatprep.subr.bf16.mxu0 0
    %1226 = vmatpush1.bf16.xpose.msra.mxu0 0
    %1227 = vmatprep.subr.bf16.mxu0 0
    %1228 = vmatpush1.bf16.xpose.msra.mxu0 0
    %1229 = vmatprep.subr.bf16.mxu0 0
    %1230 = vmatpush1.bf16.xpose.msra.mxu0 0
    %1231 = vmatprep.subr.bf16.mxu0 0
    %1232 = vmatpush1.bf16.xpose.msra.mxu0 0
    %1233 = vmatprep.subr.bf16.mxu0 0
    %1234 = vmatpush1.bf16.xpose.msra.mxu0 0
    %1235 = vmatprep.subr.bf16.mxu0 0
    %1236 = vmatpush1.bf16.xpose.msra.mxu0 0
    %1237 = vmatprep.subr.bf16.mxu0 0
    %1238 = vmatpush1.bf16.xpose.msra.mxu0 0
    %1239 = vmatprep.subr.bf16.mxu0 0
    %1240 = vmatpush1.bf16.xpose.msra.mxu0 0
    %1241 = vmatprep.mubr.bf16.mxu0 0
    %1242 = vmatmul.mubr.bf16.gmra.mrb[0].mxu0 %v1204
    %v1243 = vpop.f32.mrb[0].mxu0
    %v1244 = vadd.f32 0.0, %v1243
    %v1245 = vpop.f32.mrb[0].mxu0
    %v1246 = vpop.f32.mrb[0].mxu0
    %v1247 = vpop.f32.mrb[0].mxu0
    %1248 = vdwg.mxu0
    %v1250 = vsel %vm765, %v1103, 0
    %v1253 = vsel %vm765, %v1046, 0
    %1255 = vmatprep.subr.bf16.mxu0 0
    %1256 = vmatpush1.bf16.xpose.msra.mxu0 %v1253
    %1257 = vmatprep.subr.bf16.mxu0 0
    %1258 = vmatpush1.bf16.xpose.msra.mxu0 0
    %1259 = vmatprep.subr.bf16.mxu0 0
    %1260 = vmatpush1.bf16.xpose.msra.mxu0 0
    %1261 = vmatprep.subr.bf16.mxu0 0
    %1262 = vmatpush1.bf16.xpose.msra.mxu0 0
    %1263 = vmatprep.subr.bf16.mxu0 0
    %1264 = vmatpush1.bf16.xpose.msra.mxu0 0
    %1265 = vmatprep.subr.bf16.mxu0 0
    %1266 = vmatpush1.bf16.xpose.msra.mxu0 0
    %1267 = vmatprep.subr.bf16.mxu0 0
    %1268 = vmatpush1.bf16.xpose.msra.mxu0 0
    %1269 = vmatprep.subr.bf16.mxu0 0
    %1270 = vmatpush1.bf16.xpose.msra.mxu0 0
    %1271 = vmatprep.subr.bf16.mxu0 0
    %1272 = vmatpush1.bf16.xpose.msra.mxu0 0
    %1273 = vmatprep.subr.bf16.mxu0 0
    %1274 = vmatpush1.bf16.xpose.msra.mxu0 0
    %1275 = vmatprep.subr.bf16.mxu0 0
    %1276 = vmatpush1.bf16.xpose.msra.mxu0 0
    %1277 = vmatprep.subr.bf16.mxu0 0
    %1278 = vmatpush1.bf16.xpose.msra.mxu0 0
    %1279 = vmatprep.subr.bf16.mxu0 0
    %1280 = vmatpush1.bf16.xpose.msra.mxu0 0
    %1281 = vmatprep.subr.bf16.mxu0 0
    %1282 = vmatpush1.bf16.xpose.msra.mxu0 0
    %1283 = vmatprep.subr.bf16.mxu0 0
    %1284 = vmatpush1.bf16.xpose.msra.mxu0 0
    %1285 = vmatprep.subr.bf16.mxu0 0
    %1286 = vmatpush1.bf16.xpose.msra.mxu0 0
    %1287 = vmatprep.mubr.bf16.mxu0 0
    %1288 = vmatmul.mubr.bf16.gmra.mrb[0].mxu0 %v1250
    %v1289 = vpop.f32.mrb[0].mxu0
    %v1290 = vadd.f32 0.0, %v1289
    %v1291 = vpop.f32.mrb[0].mxu0
    %v1292 = vpop.f32.mrb[0].mxu0
    %v1293 = vpop.f32.mrb[0].mxu0
    %1294 = vdwg.mxu0
    %1295 = vxpose.xlu0.b32.start [1/16] %v1152, 128
    %1296 = vxpose.xlu0.b32.cont [2/16] 0.0, 128
    %1297 = vxpose.xlu0.b32.cont [3/16] 0.0, 128
    %1298 = vxpose.xlu0.b32.cont [4/16] 0.0, 128
    %1299 = vxpose.xlu0.b32.cont [5/16] 0.0, 128
    %1300 = vxpose.xlu0.b32.cont [6/16] 0.0, 128
    %1301 = vxpose.xlu0.b32.cont [7/16] 0.0, 128
    %1302 = vxpose.xlu0.b32.cont [8/16] 0.0, 128
    %1303 = vxpose.xlu0.b32.cont [9/16] 0.0, 128
    %1304 = vxpose.xlu0.b32.cont [10/16] 0.0, 128
    %1305 = vxpose.xlu0.b32.cont [11/16] 0.0, 128
    %1306 = vxpose.xlu0.b32.cont [12/16] 0.0, 128
    %1307 = vxpose.xlu0.b32.cont [13/16] 0.0, 128
    %1308 = vxpose.xlu0.b32.cont [14/16] 0.0, 128
    %1309 = vxpose.xlu0.b32.cont [15/16] 0.0, 128
    %1310 = vxpose.xlu0.b32.end [16/16] 0.0, 128
    %v1311 = vpop.trf.xlu0
    %v1312 = vpop.trf.xlu0
    %v1313 = vpop.trf.xlu0
    %v1314 = vpop.trf.xlu0
    %v1315 = vpop.trf.xlu0
    %v1316 = vpop.trf.xlu0
    %v1317 = vpop.trf.xlu0
    %v1318 = vpop.trf.xlu0
    %v1319 = vpop.trf.xlu0
    %v1320 = vpop.trf.xlu0
    %v1321 = vpop.trf.xlu0
    %v1322 = vpop.trf.xlu0
    %v1323 = vpop.trf.xlu0
    %v1324 = vpop.trf.xlu0
    %v1325 = vpop.trf.xlu0
    %v1326 = vpop.trf.xlu0
    %1327 = vxpose.xlu0.b32.start [1/16] %v1198, 128
    %1328 = vxpose.xlu0.b32.cont [2/16] 0.0, 128
    %1329 = vxpose.xlu0.b32.cont [3/16] 0.0, 128
    %1330 = vxpose.xlu0.b32.cont [4/16] 0.0, 128
    %1331 = vxpose.xlu0.b32.cont [5/16] 0.0, 128
    %1332 = vxpose.xlu0.b32.cont [6/16] 0.0, 128
    %1333 = vxpose.xlu0.b32.cont [7/16] 0.0, 128
    %1334 = vxpose.xlu0.b32.cont [8/16] 0.0, 128
    %1335 = vxpose.xlu0.b32.cont [9/16] 0.0, 128
    %1336 = vxpose.xlu0.b32.cont [10/16] 0.0, 128
    %1337 = vxpose.xlu0.b32.cont [11/16] 0.0, 128
    %1338 = vxpose.xlu0.b32.cont [12/16] 0.0, 128
    %1339 = vxpose.xlu0.b32.cont [13/16] 0.0, 128
    %1340 = vxpose.xlu0.b32.cont [14/16] 0.0, 128
    %1341 = vxpose.xlu0.b32.cont [15/16] 0.0, 128
    %1342 = vxpose.xlu0.b32.end [16/16] 0.0, 128
    %v1343 = vpop.trf.xlu0
    %v1344 = vpop.trf.xlu0
    %v1345 = vpop.trf.xlu0
    %v1346 = vpop.trf.xlu0
    %v1347 = vpop.trf.xlu0
    %v1348 = vpop.trf.xlu0
    %v1349 = vpop.trf.xlu0
    %v1350 = vpop.trf.xlu0
    %v1351 = vpop.trf.xlu0
    %v1352 = vpop.trf.xlu0
    %v1353 = vpop.trf.xlu0
    %v1354 = vpop.trf.xlu0
    %v1355 = vpop.trf.xlu0
    %v1356 = vpop.trf.xlu0
    %v1357 = vpop.trf.xlu0
    %v1358 = vpop.trf.xlu0
    %1359 = vxpose.xlu0.b32.start [1/16] %v1244, 128
    %1360 = vxpose.xlu0.b32.cont [2/16] 0.0, 128
    %1361 = vxpose.xlu0.b32.cont [3/16] 0.0, 128
    %1362 = vxpose.xlu0.b32.cont [4/16] 0.0, 128
    %1363 = vxpose.xlu0.b32.cont [5/16] 0.0, 128
    %1364 = vxpose.xlu0.b32.cont [6/16] 0.0, 128
    %1365 = vxpose.xlu0.b32.cont [7/16] 0.0, 128
    %1366 = vxpose.xlu0.b32.cont [8/16] 0.0, 128
    %1367 = vxpose.xlu0.b32.cont [9/16] 0.0, 128
    %1368 = vxpose.xlu0.b32.cont [10/16] 0.0, 128
    %1369 = vxpose.xlu0.b32.cont [11/16] 0.0, 128
    %1370 = vxpose.xlu0.b32.cont [12/16] 0.0, 128
    %1371 = vxpose.xlu0.b32.cont [13/16] 0.0, 128
    %1372 = vxpose.xlu0.b32.cont [14/16] 0.0, 128
    %1373 = vxpose.xlu0.b32.cont [15/16] 0.0, 128
    %1374 = vxpose.xlu0.b32.end [16/16] 0.0, 128
    %v1375 = vpop.trf.xlu0
    %v1376 = vpop.trf.xlu0
    %v1377 = vpop.trf.xlu0
    %v1378 = vpop.trf.xlu0
    %v1379 = vpop.trf.xlu0
    %v1380 = vpop.trf.xlu0
    %v1381 = vpop.trf.xlu0
    %v1382 = vpop.trf.xlu0
    %v1383 = vpop.trf.xlu0
    %v1384 = vpop.trf.xlu0
    %v1385 = vpop.trf.xlu0
    %v1386 = vpop.trf.xlu0
    %v1387 = vpop.trf.xlu0
    %v1388 = vpop.trf.xlu0
    %v1389 = vpop.trf.xlu0
    %v1390 = vpop.trf.xlu0
    %1391 = vxpose.xlu0.b32.start [1/16] %v1290, 128
    %1392 = vxpose.xlu0.b32.cont [2/16] 0.0, 128
    %1393 = vxpose.xlu0.b32.cont [3/16] 0.0, 128
    %1394 = vxpose.xlu0.b32.cont [4/16] 0.0, 128
    %1395 = vxpose.xlu0.b32.cont [5/16] 0.0, 128
    %1396 = vxpose.xlu0.b32.cont [6/16] 0.0, 128
    %1397 = vxpose.xlu0.b32.cont [7/16] 0.0, 128
    %1398 = vxpose.xlu0.b32.cont [8/16] 0.0, 128
    %1399 = vxpose.xlu0.b32.cont [9/16] 0.0, 128
    %1400 = vxpose.xlu0.b32.cont [10/16] 0.0, 128
    %1401 = vxpose.xlu0.b32.cont [11/16] 0.0, 128
    %1402 = vxpose.xlu0.b32.cont [12/16] 0.0, 128
    %1403 = vxpose.xlu0.b32.cont [13/16] 0.0, 128
    %1404 = vxpose.xlu0.b32.cont [14/16] 0.0, 128
    %1405 = vxpose.xlu0.b32.cont [15/16] 0.0, 128
    %1406 = vxpose.xlu0.b32.end [16/16] 0.0, 128
    %v1407 = vpop.trf.xlu0
    %v1408 = vpop.trf.xlu0
    %v1409 = vpop.trf.xlu0
    %v1410 = vpop.trf.xlu0
    %v1411 = vpop.trf.xlu0
    %v1412 = vpop.trf.xlu0
    %v1413 = vpop.trf.xlu0
    %v1414 = vpop.trf.xlu0
    %v1415 = vpop.trf.xlu0
    %v1416 = vpop.trf.xlu0
    %v1417 = vpop.trf.xlu0
    %v1418 = vpop.trf.xlu0
    %v1419 = vpop.trf.xlu0
    %v1420 = vpop.trf.xlu0
    %v1421 = vpop.trf.xlu0
    %v1422 = vpop.trf.xlu0
    %v1423 = vcombine.low %v1311, %v1375
    %v1424 = vcombine.high %v1311, %v1375
    %v1426 = vunpack.c.l.s4 1983009808
    %v1427 = vunpack.c.0.s8 %v1426
    %v1428 = vlaneseq
    %v1429 = vshrl.u32 %v1428, 7
    %v1430 = vsub.s32 %v1427, %v1429
    %v1431 = vrot.slane %v1423, %v1430
    %v1433 = vunpack.c.l.s4 1983009808
    %v1434 = vunpack.c.0.s8 %v1433
    %v1435 = vlaneseq
    %v1436 = vshrl.u32 %v1435, 7
    %v1437 = vsub.s32 %v1434, %v1436
    %v1438 = vrot.slane %v1424, %v1437
    %v1439 = vcombine.low %v1343, %v1407
    %v1440 = vcombine.high %v1343, %v1407
    %v1442 = vunpack.c.l.s4 1983009808
    %v1443 = vunpack.c.0.s8 %v1442
    %v1444 = vlaneseq
    %v1445 = vshrl.u32 %v1444, 7
    %v1446 = vsub.s32 %v1443, %v1445
    %v1447 = vrot.slane %v1439, %v1446
    %v1449 = vunpack.c.l.s4 1983009808
    %v1450 = vunpack.c.0.s8 %v1449
    %v1451 = vlaneseq
    %v1452 = vshrl.u32 %v1451, 7
    %v1453 = vsub.s32 %v1450, %v1452
    %v1454 = vrot.slane %v1440, %v1453
    %v1455 = vcombine.low %v1431, %v1447
    %v1456 = vcombine.high %v1431, %v1447
    %v1458 = vunpack.c.l.s4 1934713408
    %v1459 = vunpack.c.0.s8 %v1458
    %v1460 = vlaneseq
    %v1461 = vshrl.u32 %v1460, 7
    %v1462 = vsub.s32 %v1459, %v1461
    %v1463 = vrot.slane %v1455, %v1462
    %v1465 = vunpack.c.l.s4 1934713408
    %v1466 = vunpack.c.0.s8 %v1465
    %v1467 = vlaneseq
    %v1468 = vshrl.u32 %v1467, 7
    %v1469 = vsub.s32 %v1466, %v1468
    %v1470 = vrot.slane %v1456, %v1469
    %v1471 = vcombine.low %v1438, %v1454
    %v1472 = vcombine.high %v1438, %v1454
    %v1474 = vunpack.c.l.s4 1934713408
    %v1475 = vunpack.c.0.s8 %v1474
    %v1476 = vlaneseq
    %v1477 = vshrl.u32 %v1476, 7
    %v1478 = vsub.s32 %v1475, %v1477
    %v1479 = vrot.slane %v1471, %v1478
    %v1481 = vunpack.c.l.s4 1934713408
    %v1482 = vunpack.c.0.s8 %v1481
    %v1483 = vlaneseq
    %v1484 = vshrl.u32 %v1483, 7
    %v1485 = vsub.s32 %v1482, %v1484
    %v1486 = vrot.slane %v1472, %v1485
    %v1487 = vcombine.high %v1463, 0.0
    %v1488 = vcombine.high %v1470, 0.0
    %v1489 = vcombine.high %v1479, 0.0
    %v1490 = vcombine.high %v1486, 0.0
    %v1491 = vcombine.low %v1312, %v1376
    %v1492 = vcombine.high %v1312, %v1376
    %v1494 = vunpack.c.l.s4 1983009808
    %v1495 = vunpack.c.0.s8 %v1494
    %v1496 = vlaneseq
    %v1497 = vshrl.u32 %v1496, 7
    %v1498 = vsub.s32 %v1495, %v1497
    %v1499 = vrot.slane %v1491, %v1498
    %v1501 = vunpack.c.l.s4 1983009808
    %v1502 = vunpack.c.0.s8 %v1501
    %v1503 = vlaneseq
    %v1504 = vshrl.u32 %v1503, 7
    %v1505 = vsub.s32 %v1502, %v1504
    %v1506 = vrot.slane %v1492, %v1505
    %v1507 = vcombine.low %v1344, %v1408
    %v1508 = vcombine.high %v1344, %v1408
    %v1510 = vunpack.c.l.s4 1983009808
    %v1511 = vunpack.c.0.s8 %v1510
    %v1512 = vlaneseq
    %v1513 = vshrl.u32 %v1512, 7
    %v1514 = vsub.s32 %v1511, %v1513
    %v1515 = vrot.slane %v1507, %v1514
    %v1517 = vunpack.c.l.s4 1983009808
    %v1518 = vunpack.c.0.s8 %v1517
    %v1519 = vlaneseq
    %v1520 = vshrl.u32 %v1519, 7
    %v1521 = vsub.s32 %v1518, %v1520
    %v1522 = vrot.slane %v1508, %v1521
    %v1523 = vcombine.low %v1499, %v1515
    %v1524 = vcombine.high %v1499, %v1515
    %v1526 = vunpack.c.l.s4 1934713408
    %v1527 = vunpack.c.0.s8 %v1526
    %v1528 = vlaneseq
    %v1529 = vshrl.u32 %v1528, 7
    %v1530 = vsub.s32 %v1527, %v1529
    %v1531 = vrot.slane %v1523, %v1530
    %v1533 = vunpack.c.l.s4 1934713408
    %v1534 = vunpack.c.0.s8 %v1533
    %v1535 = vlaneseq
    %v1536 = vshrl.u32 %v1535, 7
    %v1537 = vsub.s32 %v1534, %v1536
    %v1538 = vrot.slane %v1524, %v1537
    %v1539 = vcombine.low %v1506, %v1522
    %v1540 = vcombine.high %v1506, %v1522
    %v1542 = vunpack.c.l.s4 1934713408
    %v1543 = vunpack.c.0.s8 %v1542
    %v1544 = vlaneseq
    %v1545 = vshrl.u32 %v1544, 7
    %v1546 = vsub.s32 %v1543, %v1545
    %v1547 = vrot.slane %v1539, %v1546
    %v1549 = vunpack.c.l.s4 1934713408
    %v1550 = vunpack.c.0.s8 %v1549
    %v1551 = vlaneseq
    %v1552 = vshrl.u32 %v1551, 7
    %v1553 = vsub.s32 %v1550, %v1552
    %v1554 = vrot.slane %v1540, %v1553
    %v1555 = vcombine.high %v1531, 0.0
    %v1556 = vcombine.high %v1538, 0.0
    %v1557 = vcombine.high %v1547, 0.0
    %v1558 = vcombine.high %v1554, 0.0
    %v1559 = vcombine.low %v1463, %v1470
    %v1561 = vunpack.c.l.s4 1983009808
    %v1562 = vunpack.c.0.s8 %v1561
    %v1563 = vlaneseq
    %v1564 = vshrl.u32 %v1563, 7
    %v1565 = vsub.s32 %v1562, %v1564
    %v1566 = vrot.slane %v1559, %v1565
    %v1567 = vcombine.low %v1487, %v1488
    %v1569 = vunpack.c.l.s4 1983009808
    %v1570 = vunpack.c.0.s8 %v1569
    %v1571 = vlaneseq
    %v1572 = vshrl.u32 %v1571, 7
    %v1573 = vsub.s32 %v1570, %v1572
    %v1574 = vrot.slane %v1567, %v1573
    %v1575 = vcombine.low %v1479, %v1486
    %v1577 = vunpack.c.l.s4 1983009808
    %v1578 = vunpack.c.0.s8 %v1577
    %v1579 = vlaneseq
    %v1580 = vshrl.u32 %v1579, 7
    %v1581 = vsub.s32 %v1578, %v1580
    %v1582 = vrot.slane %v1575, %v1581
    %v1583 = vcombine.low %v1489, %v1490
    %v1585 = vunpack.c.l.s4 1983009808
    %v1586 = vunpack.c.0.s8 %v1585
    %v1587 = vlaneseq
    %v1588 = vshrl.u32 %v1587, 7
    %v1589 = vsub.s32 %v1586, %v1588
    %v1590 = vrot.slane %v1583, %v1589
    %v1591 = vcombine.low %v1566, %v1574
    %v1592 = vcombine.high %v1566, %v1574
    %v1594 = vunpack.c.l.s4 1934713408
    %v1595 = vunpack.c.0.s8 %v1594
    %v1596 = vlaneseq
    %v1597 = vshrl.u32 %v1596, 7
    %v1598 = vsub.s32 %v1595, %v1597
    %v1599 = vrot.slane %v1591, %v1598
    %v1601 = vunpack.c.l.s4 1934713408
    %v1602 = vunpack.c.0.s8 %v1601
    %v1603 = vlaneseq
    %v1604 = vshrl.u32 %v1603, 7
    %v1605 = vsub.s32 %v1602, %v1604
    %v1606 = vrot.slane %v1592, %v1605
    %v1607 = vcombine.low %v1582, %v1590
    %v1608 = vcombine.high %v1582, %v1590
    %v1610 = vunpack.c.l.s4 1934713408
    %v1611 = vunpack.c.0.s8 %v1610
    %v1612 = vlaneseq
    %v1613 = vshrl.u32 %v1612, 7
    %v1614 = vsub.s32 %v1611, %v1613
    %v1615 = vrot.slane %v1607, %v1614
    %v1617 = vunpack.c.l.s4 1934713408
    %v1618 = vunpack.c.0.s8 %v1617
    %v1619 = vlaneseq
    %v1620 = vshrl.u32 %v1619, 7
    %v1621 = vsub.s32 %v1618, %v1620
    %v1622 = vrot.slane %v1608, %v1621
    %v1623 = vcombine.low %v1599, %v1615
    %v1624 = vcombine.high %v1599, %v1615
    %v1625 = vcombine.low %v1606, %v1622
    %v1626 = vcombine.high %v1606, %v1622
    %v1627 = vcombine.low %v1531, %v1538
    %v1629 = vunpack.c.l.s4 1983009808
    %v1630 = vunpack.c.0.s8 %v1629
    %v1631 = vlaneseq
    %v1632 = vshrl.u32 %v1631, 7
    %v1633 = vsub.s32 %v1630, %v1632
    %v1634 = vrot.slane %v1627, %v1633
    %v1635 = vcombine.low %v1555, %v1556
    %v1637 = vunpack.c.l.s4 1983009808
    %v1638 = vunpack.c.0.s8 %v1637
    %v1639 = vlaneseq
    %v1640 = vshrl.u32 %v1639, 7
    %v1641 = vsub.s32 %v1638, %v1640
    %v1642 = vrot.slane %v1635, %v1641
    %v1643 = vcombine.low %v1547, %v1554
    %v1645 = vunpack.c.l.s4 1983009808
    %v1646 = vunpack.c.0.s8 %v1645
    %v1647 = vlaneseq
    %v1648 = vshrl.u32 %v1647, 7
    %v1649 = vsub.s32 %v1646, %v1648
    %v1650 = vrot.slane %v1643, %v1649
    %v1651 = vcombine.low %v1557, %v1558
    %v1653 = vunpack.c.l.s4 1983009808
    %v1654 = vunpack.c.0.s8 %v1653
    %v1655 = vlaneseq
    %v1656 = vshrl.u32 %v1655, 7
    %v1657 = vsub.s32 %v1654, %v1656
    %v1658 = vrot.slane %v1651, %v1657
    %v1659 = vcombine.low %v1634, %v1642
    %v1660 = vcombine.high %v1634, %v1642
    %v1662 = vunpack.c.l.s4 1934713408
    %v1663 = vunpack.c.0.s8 %v1662
    %v1664 = vlaneseq
    %v1665 = vshrl.u32 %v1664, 7
    %v1666 = vsub.s32 %v1663, %v1665
    %v1667 = vrot.slane %v1659, %v1666
    %v1669 = vunpack.c.l.s4 1934713408
    %v1670 = vunpack.c.0.s8 %v1669
    %v1671 = vlaneseq
    %v1672 = vshrl.u32 %v1671, 7
    %v1673 = vsub.s32 %v1670, %v1672
    %v1674 = vrot.slane %v1660, %v1673
    %v1675 = vcombine.low %v1650, %v1658
    %v1676 = vcombine.high %v1650, %v1658
    %v1678 = vunpack.c.l.s4 1934713408
    %v1679 = vunpack.c.0.s8 %v1678
    %v1680 = vlaneseq
    %v1681 = vshrl.u32 %v1680, 7
    %v1682 = vsub.s32 %v1679, %v1681
    %v1683 = vrot.slane %v1675, %v1682
    %v1685 = vunpack.c.l.s4 1934713408
    %v1686 = vunpack.c.0.s8 %v1685
    %v1687 = vlaneseq
    %v1688 = vshrl.u32 %v1687, 7
    %v1689 = vsub.s32 %v1686, %v1688
    %v1690 = vrot.slane %v1676, %v1689
    %v1691 = vcombine.low %v1667, %v1683
    %v1692 = vcombine.high %v1667, %v1683
    %v1693 = vcombine.low %v1674, %v1690
    %v1694 = vcombine.high %v1674, %v1690
    %1697 = vrot.lane.b32.xlu0 %v1624, 8
    %v1698 = vpop.permute.xlu0 %1697
    %1699 = vrot.lane.b32.xlu0 %v1692, 8
    %v1700 = vpop.permute.xlu0 %1699
    %1705 = vrot.lane.b32.xlu0 %v1625, 16
    %v1706 = vpop.permute.xlu0 %1705
    %1707 = vrot.lane.b32.xlu0 %v1693, 16
    %v1708 = vpop.permute.xlu0 %1707
    %1713 = vrot.lane.b32.xlu0 %v1626, 24
    %v1714 = vpop.permute.xlu0 %1713
    %1715 = vrot.lane.b32.xlu0 %v1694, 24
    %v1716 = vpop.permute.xlu0 %1715
    %v1719 = vsel %vm765, %v1623, %v1698
    %v1720 = vsel %vm765, %v1691, %v1700
    %vm1721 = vcmask 130048
    %v1722 = vsel %vm1721, %v1719, %v1706
    %v1723 = vsel %vm1721, %v1720, %v1708
    %vm1724 = vcmask 195584
    %v1725 = vsel %vm1724, %v1722, %v1714
    %v1726 = vsel %vm1724, %v1723, %v1716
    %v1727 = vpack.c.bf16 %v1726, %v1725
    %v1728 = vld [vmem:[%s9] sm:$0xf]
    %v1729 = vld [vmem:[%s9 + $0x4] sm:$0xf]
    %v1730 = vld [vmem:[%s9 + $0x8] sm:$0xf]
    %v1731 = vld [vmem:[%s9 + $0xc] sm:$0xf]
    %v1732 = vld [vmem:[%s10] sm:$0x1]
    %v1734 = vlaneseq
    %v1735 = vshrl.u32 %v1734, 7
    %v1736 = vsub.s32 0, %v1735
    %v1737 = vrot.slane %v1732, %v1736
    %v1743 = vunpack.c.l.b16 %v1728
    %v1744 = vunpack.c.l.b16 %v1729
    %v1745 = vunpack.c.l.b16 %v1730
    %v1746 = vunpack.c.l.b16 %v1731
    %v1747 = vpack.c.b16 %v1744, %v1743
    %v1748 = vpack.c.b16 %v1746, %v1745
    %vm1751 = vcmask 261120
    %v1753 = vsel %vm1751, %v1727, 0
    %1755 = vmatprep.subr.bf16.mxu0 0
    %1756 = vmatpush1.bf16.msra.mxu0 %v1747
    %1757 = vmatprep.subr.bf16.mxu0 0
    %1758 = vmatpush1.bf16.msra.mxu0 %v1748
    %1759 = vmatprep.subr.bf16.mxu0 0
    %1760 = vmatpush1.bf16.msra.mxu0 0
    %1761 = vmatprep.subr.bf16.mxu0 0
    %1762 = vmatpush1.bf16.msra.mxu0 0
    %1763 = vmatprep.subr.bf16.mxu0 0
    %1764 = vmatpush1.bf16.msra.mxu0 0
    %1765 = vmatprep.subr.bf16.mxu0 0
    %1766 = vmatpush1.bf16.msra.mxu0 0
    %1767 = vmatprep.subr.bf16.mxu0 0
    %1768 = vmatpush1.bf16.msra.mxu0 0
    %1769 = vmatprep.subr.bf16.mxu0 0
    %1770 = vmatpush1.bf16.msra.mxu0 0
    %1771 = vmatprep.subr.bf16.mxu0 0
    %1772 = vmatpush1.bf16.msra.mxu0 0
    %1773 = vmatprep.subr.bf16.mxu0 0
    %1774 = vmatpush1.bf16.msra.mxu0 0
    %1775 = vmatprep.subr.bf16.mxu0 0
    %1776 = vmatpush1.bf16.msra.mxu0 0
    %1777 = vmatprep.subr.bf16.mxu0 0
    %1778 = vmatpush1.bf16.msra.mxu0 0
    %1779 = vmatprep.subr.bf16.mxu0 0
    %1780 = vmatpush1.bf16.msra.mxu0 0
    %1781 = vmatprep.subr.bf16.mxu0 0
    %1782 = vmatpush1.bf16.msra.mxu0 0
    %1783 = vmatprep.subr.bf16.mxu0 0
    %1784 = vmatpush1.bf16.msra.mxu0 0
    %1785 = vmatprep.subr.bf16.mxu0 0
    %1786 = vmatpush1.bf16.msra.mxu0 0
    %1787 = vmatprep.mubr.bf16.mxu0 0
    %1788 = vmatmul.mubr.bf16.gmra.mrb[0].mxu0 %v1753
    %v1789 = vpop.f32.mrb[0].mxu0
    %v1790 = vadd.f32 %v1737, %v1789
    %v1791 = vpop.f32.mrb[0].mxu0
    %v1792 = vpop.f32.mrb[0].mxu0
    %v1793 = vadd.f32 %v1737, %v1792
    %v1794 = vpop.f32.mrb[0].mxu0
    %1795 = vdwg.mxu0
    %1796 = vst [vmem:[#allocation4] sm:$0xff] %v1790
    %1797 = vst [vmem:[#allocation4 + $0x8] sm:$0xff] %v1793
    // Predicated region
    $region50: #{tpu_custom_call.1} parent=1 // pred_check
      _
    $region51: #{tpu_custom_call.1} parent=1 // pred_check_branch
      %1799 = sbr.rel (0) target = $region53
    $region52: #{tpu_custom_call.1} parent=1 // pred_region
      %s1801 = ssub.s32 256, 256
      %1802 = vsyncadd [#allocation5], %s1801
      %s1803 = sshll.u32 [#allocation4], 4
      %s1804 = int_to_ptr.vmem [resolvable:$true] %s1803
      %1809 = dma.vmem_to_hbm [thread:$0]  %s1804, 256, %s11, [#allocation5], 128, 128, 8
    $region53: #{tpu_custom_call.1} parent=1 // pred_fallthru
      _
    // Predicated region
    $region54: #{tpu_custom_call.1} parent=1 // pred_check
      _
    $region55: #{tpu_custom_call.1} parent=1 // pred_check_branch
      %1811 = sbr.rel (0) target = $region57
    $region56: #{tpu_custom_call.1} parent=1 // pred_region
      %1812 = dma.done [#allocation5], 256
    $region57: #{tpu_custom_call.1} parent=1 // pred_fallthru
      _
    %1813 = vsyncpa [#allocation5], 1

</llo_original>
